<compile_context>
chip_gen: v5e
topology: v5e:2x2
jax: 0.10.0
libtpu: 0.0.40
codegen_flags: <defaults>
</compile_context>

<pallas_src>
import functools

import jax
import jax.numpy as jnp
from jax.experimental import pallas as pl
from jax.experimental.pallas import tpu as pltpu

EPS = 1e-3


def _bn_kernel(x_ref, gamma_ref, beta_ref, o_ref, *, eps):
    # x_ref: (N, c_tile, HW) f32; gamma_ref/beta_ref: (1, c_tile, 1) f32
    x = x_ref[...]
    n = x.shape[0] * x.shape[2]          # static: N * H * W
    inv_n = 1.0 / n

    # Fused single sweep: sum and sum-of-squares issued back-to-back so the
    # XLU lane reductions overlap with the VALU multiply.
    s = jnp.sum(x, axis=2, keepdims=True)          # (N, c_tile, 1)
    sq = jnp.sum(x * x, axis=2, keepdims=True)     # (N, c_tile, 1)
    if x.shape[0] > 1:                             # fold batch axis (static)
        s = jnp.sum(s, axis=0, keepdims=True)
        sq = jnp.sum(sq, axis=0, keepdims=True)

    mean = s * inv_n
    var = sq * inv_n - mean * mean                 # biased variance

    # Fold the affine transform into a per-channel scale / shift.
    scale = gamma_ref[...] * jax.lax.rsqrt(var + eps)   # (1, c_tile, 1)
    shift = beta_ref[...] - mean * scale
    o_ref[...] = x * scale + shift


def batchnorm2d(x, gamma, beta, *, eps=EPS, c_tile=528):
    """BatchNorm2d forward (training-mode batch statistics), NCHW input."""
    N, C, H, W = x.shape
    HW = H * W
    if C % c_tile != 0 or c_tile % 8 != 0:
        c_tile = C  # single grid step; a full-extent channel block is always legal

    # Free reshapes only (row-major contiguous) — no HBM transposes.
    x3 = x.reshape(N, C, HW).astype(jnp.float32)
    g3 = gamma.reshape(1, C, 1).astype(jnp.float32)
    b3 = beta.reshape(1, C, 1).astype(jnp.float32)

    out3 = pl.pallas_call(
        functools.partial(_bn_kernel, eps=eps),
        out_shape=jax.ShapeDtypeStruct((N, C, HW), jnp.float32),
        grid_spec=pltpu.PrefetchScalarGridSpec(
            num_scalar_prefetch=0,
            grid=(C // c_tile,),
            in_specs=[
                pl.BlockSpec((N, c_tile, HW), lambda i: (0, i, 0)),
                pl.BlockSpec((1, c_tile, 1), lambda i: (0, i, 0)),
                pl.BlockSpec((1, c_tile, 1), lambda i: (0, i, 0)),
            ],
            out_specs=pl.BlockSpec((N, c_tile, HW), lambda i: (0, i, 0)),
        ),
        compiler_params=pltpu.CompilerParams(
            dimension_semantics=("parallel",),
        ),
    )(x3, g3, b3)

    # TODO(synk): running_mean/running_var momentum update is a stateful buffer
    # update and does not affect the forward output; not materialized here.
    return out3.reshape(N, C, H, W).astype(x.dtype)


if __name__ == "__main__":
    key = jax.random.PRNGKey(0)
    N, C, H, W = 1, 1056, 14, 14
    x = jax.random.normal(key, (N, C, H, W), dtype=jnp.float32)

    # BatchNorm2d default parameter init: weight (gamma) = 1, bias (beta) = 0
    gamma = jnp.ones((C,), dtype=jnp.float32)
    beta = jnp.zeros((C,), dtype=jnp.float32)

    out = jax.block_until_ready(batchnorm2d(x, gamma, beta))

    # Pure-JAX reference (training-mode batch norm, biased variance)
    mean = jnp.mean(x, axis=(0, 2, 3), keepdims=True)
    var = jnp.mean((x - mean) ** 2, axis=(0, 2, 3), keepdims=True)
    ref = (x - mean) / jnp.sqrt(var + EPS) * gamma.reshape(1, C, 1, 1) \
        + beta.reshape(1, C, 1, 1)

    assert out.shape == (N, C, H, W)
    assert jnp.allclose(out, ref, atol=1e-4, rtol=1e-4)
    print("KERNEL_OK")
</pallas_src>

<mosaic_0001>
module attributes {stable_mosaic.version = 11 : i64} {
  func.func @_bn_kernel(%arg0: i32, %arg1: memref<1x528x196xf32, #tpu.memory_space<vmem>>, %arg2: memref<1x528x1xf32, #tpu.memory_space<vmem>>, %arg3: memref<1x528x1xf32, #tpu.memory_space<vmem>>, %arg4: memref<1x528x196xf32, #tpu.memory_space<vmem>>) attributes {dimension_semantics = [#tpu.dimension_semantics<parallel>], iteration_bounds = array<i64: 2>, scalar_prefetch = 0 : i64, scratch_operands = 0 : i64, tpu.core_type = #tpu.core_type<tc>, window_params = [{transform_indices = @transform_0, window_bounds = array<i64: 1, 528, 196>}, {transform_indices = @transform_1, window_bounds = array<i64: 1, 528, 1>}, {transform_indices = @transform_2, window_bounds = array<i64: 1, 528, 1>}, {transform_indices = @transform_3, window_bounds = array<i64: 1, 528, 196>}]} {
    %c0 = arith.constant 0 : index
    %c0_0 = arith.constant 0 : index
    %c0_1 = arith.constant 0 : index
    %0 = vector.load %arg1[%c0, %c0_0, %c0_1] : memref<1x528x196xf32, #tpu.memory_space<vmem>>, vector<1x528x196xf32>
    %cst = arith.constant dense<0.000000e+00> : vector<1x528xf32>
    %1 = vector.multi_reduction <add>, %0, %cst [2] : vector<1x528x196xf32> to vector<1x528xf32>
    %2 = vector.shape_cast %1 : vector<1x528xf32> to vector<1x528x1xf32>
    %3 = arith.mulf %0, %0 : vector<1x528x196xf32>
    %cst_2 = arith.constant dense<0.000000e+00> : vector<1x528xf32>
    %4 = vector.multi_reduction <add>, %3, %cst_2 [2] : vector<1x528x196xf32> to vector<1x528xf32>
    %5 = vector.shape_cast %4 : vector<1x528xf32> to vector<1x528x1xf32>
    %cst_3 = arith.constant 0.00510204071 : f32
    %6 = vector.broadcast %cst_3 : f32 to vector<1x528x1xf32>
    %7 = arith.mulf %2, %6 : vector<1x528x1xf32>
    %cst_4 = arith.constant 0.00510204071 : f32
    %8 = vector.broadcast %cst_4 : f32 to vector<1x528x1xf32>
    %9 = arith.mulf %5, %8 : vector<1x528x1xf32>
    %10 = arith.mulf %7, %7 : vector<1x528x1xf32>
    %11 = arith.subf %9, %10 : vector<1x528x1xf32>
    %c0_5 = arith.constant 0 : index
    %c0_6 = arith.constant 0 : index
    %c0_7 = arith.constant 0 : index
    %12 = vector.load %arg2[%c0_5, %c0_6, %c0_7] : memref<1x528x1xf32, #tpu.memory_space<vmem>>, vector<1x528x1xf32>
    %cst_8 = arith.constant 1.000000e-03 : f32
    %13 = vector.broadcast %cst_8 : f32 to vector<1x528x1xf32>
    %14 = arith.addf %11, %13 : vector<1x528x1xf32>
    %15 = math.rsqrt %14 : vector<1x528x1xf32>
    %16 = arith.mulf %12, %15 : vector<1x528x1xf32>
    %c0_9 = arith.constant 0 : index
    %c0_10 = arith.constant 0 : index
    %c0_11 = arith.constant 0 : index
    %17 = vector.load %arg3[%c0_9, %c0_10, %c0_11] : memref<1x528x1xf32, #tpu.memory_space<vmem>>, vector<1x528x1xf32>
    %18 = arith.mulf %7, %16 : vector<1x528x1xf32>
    %19 = arith.subf %17, %18 : vector<1x528x1xf32>
    %20 = vector.broadcast %16 : vector<1x528x1xf32> to vector<1x528x196xf32>
    %21 = arith.mulf %0, %20 : vector<1x528x196xf32>
    %22 = vector.broadcast %19 : vector<1x528x1xf32> to vector<1x528x196xf32>
    %23 = arith.addf %21, %22 : vector<1x528x196xf32>
    %c0_12 = arith.constant 0 : index
    %c0_13 = arith.constant 0 : index
    %c0_14 = arith.constant 0 : index
    %24 = vector.load %arg4[%c0_12, %c0_13, %c0_14] : memref<1x528x196xf32, #tpu.memory_space<vmem>>, vector<1x528x196xf32>
    tpu.vector_store %arg4[%c0_12, %c0_13, %c0_14], %23 {strides = array<i32>} : memref<1x528x196xf32, #tpu.memory_space<vmem>>, vector<1x528x196xf32>,
    return
  }
  func.func @transform_0(%arg0: i32) -> (i32, i32, i32) {
    %c0_i32 = arith.constant 0 : i32
    %c0_i32_0 = arith.constant 0 : i32
    %c0_i32_1 = arith.constant 0 : i32
    return %c0_i32, %arg0, %c0_i32_0 : i32, i32, i32
  }
  func.func @transform_1(%arg0: i32) -> (i32, i32, i32) {
    %c0_i32 = arith.constant 0 : i32
    %c0_i32_0 = arith.constant 0 : i32
    %c0_i32_1 = arith.constant 0 : i32
    return %c0_i32, %arg0, %c0_i32_0 : i32, i32, i32
  }
  func.func @transform_2(%arg0: i32) -> (i32, i32, i32) {
    %c0_i32 = arith.constant 0 : i32
    %c0_i32_0 = arith.constant 0 : i32
    %c0_i32_1 = arith.constant 0 : i32
    return %c0_i32, %arg0, %c0_i32_0 : i32, i32, i32
  }
  func.func @transform_3(%arg0: i32) -> (i32, i32, i32) {
    %c0_i32 = arith.constant 0 : i32
    %c0_i32_0 = arith.constant 0 : i32
    %c0_i32_1 = arith.constant 0 : i32
    return %c0_i32, %arg0, %c0_i32_0 : i32, i32, i32
  }
}

</mosaic_0001>

<llo_original>
// kernel: tpu_custom_call.1
$region0: #{tpu_custom_call.1}
  #allocation0 [shape = 'u32[]', space=smem, size = 0x4, offset = 0x4, fixed_abs, tag = 'smem constant byte address 0x4 - core index']
  #allocation1 [shape = 'u32[72,128]{1,0:T(1,128)}', space=vmem, size = 0x9000, scoped, tag = 'internal scratch']
  %s0 = inlined_call_operand.vmem [shape: f32[1,1056,196], index: 0, kind: input, shape index: {}]
  %s1 = inlined_call_operand.vmem [shape: f32[1,1056,1], index: 1, kind: input, shape index: {}]
  %s2 = inlined_call_operand.vmem [shape: f32[1,1056,1], index: 2, kind: input, shape index: {}]
  %s3 = inlined_call_operand.vmem [shape: f32[1,1056,196], index: 3, kind: output, shape index: {}]
  %s4 = sld [smem:[#allocation0]]
  $region45: #{tpu_custom_call.1} parent=0
    _
  %s6 = ssub.s32 1, %s4
  %s7 = scalar_select 0, %s6, %s4
  loop: start=0, step=1, limit=4
  $region2: #{tpu_custom_call.1} parent=0 // loop_pre_header
    _
  $region3: #{tpu_custom_call.1} parent=0 // loop_header
    %s9 = sphi 0, %s13
    %p10 = scmp.ge.s32.totalorder %s9, 4
    %s19 = sphi 0, %s21
    %s22 = sphi 0, %s19
    %s23 = sphi 0, %s22
    %s39 = sphi 0, %s23
    %s45 = sphi 0, %s47
    %s48 = sphi 0, %s45
    %s49 = sphi 0, %s48
    %s65 = sphi 0, %s49
    %s71 = sphi 0, %s73
    %s74 = sphi 0, %s71
    %s75 = sphi 0, %s74
    %s91 = sphi 0, %s75
    %s97 = sphi 0, %s99
    %s100 = sphi 0, %s97
    %s101 = sphi 0, %s100
    %s117 = sphi 0, %s101
  $region4: #{tpu_custom_call.1} parent=0 // loop_header_branch
    %12 = sbr.rel (%p10) target = $region8
  $region5: #{tpu_custom_call.1} parent=0 // loop_body
    %s14 = ssub.s32 %s9, 1
    %s15 = ssub.s32 %s9, 2
    %s16 = sadd.s32 %s9, 1
    %s17 = ssub.s32 %s9, %s16
    %p18 = scmp.eq.s32.totalorder %s17, 0
    %s20 = sadd.s32 %s19, 1
    %s21 = scalar_select %p18, %s19, %s20
    %p24 = pneg %p18
    %p25 = scmp.eq.s32.totalorder %s9, 1
    %p26 = por %p24, %p25
    %p27 = scmp.ne.s32.totalorder %s19, %s22
    %p28 = scmp.eq.s32.totalorder %s9, 0
    %p29 = por %p27, %p28
    %p30 = scmp.ne.s32.totalorder %s19, %s22
    %p31 = scmp.eq.s32.totalorder %s14, 1
    %p32 = por %p30, %p31
    %p33 = scmp.ne.s32.totalorder %s22, %s23
    %p34 = scmp.eq.s32.totalorder %s14, 0
    %p35 = por %p33, %p34
    %p36 = scmp.ne.s32.totalorder %s22, %s23
    %p37 = scmp.eq.s32.totalorder %s15, 1
    %p38 = por %p36, %p37
    %p40 = scmp.ne.s32.totalorder %s23, %s39
    %p41 = scmp.eq.s32.totalorder %s15, 0
    %p42 = por %p40, %p41
    %s43 = ssub.s32 %s9, %s16
    %p44 = scmp.eq.s32.totalorder %s43, 0
    %s46 = sadd.s32 %s45, 1
    %s47 = scalar_select %p44, %s45, %s46
    %p50 = pneg %p44
    %p51 = scmp.eq.s32.totalorder %s9, 1
    %p52 = por %p50, %p51
    %p53 = scmp.ne.s32.totalorder %s45, %s48
    %p54 = scmp.eq.s32.totalorder %s9, 0
    %p55 = por %p53, %p54
    %p56 = scmp.ne.s32.totalorder %s45, %s48
    %p57 = scmp.eq.s32.totalorder %s14, 1
    %p58 = por %p56, %p57
    %p59 = scmp.ne.s32.totalorder %s48, %s49
    %p60 = scmp.eq.s32.totalorder %s14, 0
    %p61 = por %p59, %p60
    %p62 = scmp.ne.s32.totalorder %s48, %s49
    %p63 = scmp.eq.s32.totalorder %s15, 1
    %p64 = por %p62, %p63
    %p66 = scmp.ne.s32.totalorder %s49, %s65
    %p67 = scmp.eq.s32.totalorder %s15, 0
    %p68 = por %p66, %p67
    %s69 = ssub.s32 %s9, %s16
    %p70 = scmp.eq.s32.totalorder %s69, 0
    %s72 = sadd.s32 %s71, 1
    %s73 = scalar_select %p70, %s71, %s72
    %p76 = pneg %p70
    %p77 = scmp.eq.s32.totalorder %s9, 1
    %p78 = por %p76, %p77
    %p79 = scmp.ne.s32.totalorder %s71, %s74
    %p80 = scmp.eq.s32.totalorder %s9, 0
    %p81 = por %p79, %p80
    %p82 = scmp.ne.s32.totalorder %s71, %s74
    %p83 = scmp.eq.s32.totalorder %s14, 1
    %p84 = por %p82, %p83
    %p85 = scmp.ne.s32.totalorder %s74, %s75
    %p86 = scmp.eq.s32.totalorder %s14, 0
    %p87 = por %p85, %p86
    %p88 = scmp.ne.s32.totalorder %s74, %s75
    %p89 = scmp.eq.s32.totalorder %s15, 1
    %p90 = por %p88, %p89
    %p92 = scmp.ne.s32.totalorder %s75, %s91
    %p93 = scmp.eq.s32.totalorder %s15, 0
    %p94 = por %p92, %p93
    %s95 = ssub.s32 %s9, %s16
    %p96 = scmp.eq.s32.totalorder %s95, 0
    %s98 = sadd.s32 %s97, 1
    %s99 = scalar_select %p96, %s97, %s98
    %p102 = pneg %p96
    %p103 = scmp.eq.s32.totalorder %s9, 1
    %p104 = por %p102, %p103
    %p105 = scmp.ne.s32.totalorder %s97, %s100
    %p106 = scmp.eq.s32.totalorder %s9, 0
    %p107 = por %p105, %p106
    %p108 = scmp.ne.s32.totalorder %s97, %s100
    %p109 = scmp.eq.s32.totalorder %s14, 1
    %p110 = por %p108, %p109
    %p111 = scmp.ne.s32.totalorder %s100, %s101
    %p112 = scmp.eq.s32.totalorder %s14, 0
    %p113 = por %p111, %p112
    %p114 = scmp.ne.s32.totalorder %s100, %s101
    %p115 = scmp.eq.s32.totalorder %s15, 1
    %p116 = por %p114, %p115
    %p118 = scmp.ne.s32.totalorder %s101, %s117
    %p119 = scmp.eq.s32.totalorder %s15, 0
    %p120 = por %p118, %p119
    %p121 = scmp.le.s32.totalorder 1, %s9
    %p122 = scmp.lt.s32.totalorder %s9, 3
    %p123 = pnand %p121, %p122
    %p124 = pneg %p123
    // Predicated region
    $region9: #{tpu_custom_call.1} parent=5 // pred_check
      _
    $region10: #{tpu_custom_call.1} parent=5 // pred_check_branch
      %126 = sbr.rel (%p123) target = $region12
    $region11: #{tpu_custom_call.1} parent=5 // pred_region
      %s127 = ssub.s32 %s9, 1
    $region12: #{tpu_custom_call.1} parent=5 // pred_fallthru
      _
    %p128 = scmp.lt.s32.totalorder %s9, 2
    // Predicated region
    $region13: #{tpu_custom_call.1} parent=5 // pred_check
      %p129 = pneg %p128
    $region14: #{tpu_custom_call.1} parent=5 // pred_check_branch
      %131 = sbr.rel (%p129) target = $region16
    $region15: #{tpu_custom_call.1} parent=5 // pred_region
      // Predicated region
      $region17: #{tpu_custom_call.1} parent=15 // pred_check
        %p132 = pneg %p29
      $region18: #{tpu_custom_call.1} parent=15 // pred_check_branch
        %134 = sbr.rel (%p132) target = $region20
      $region19: #{tpu_custom_call.1} parent=15 // pred_region
        %s135 = smul.u32 66, %s9
        %p136 = scmp.lt.s32.totalorder %s135, 131
        %s137 = scalar_select %p136, %s135, 131
        %s138 = smul.addr %s137, 2
        %s139 = smul.addr %s138, 8
        %s140 = scalar_lea.vmem %s0, %s139
        %s141 = smul.u32 66, %s9
      $region20: #{tpu_custom_call.1} parent=15 // pred_fallthru
        _
      // Predicated region
      $region21: #{tpu_custom_call.1} parent=15 // pred_check
        %p142 = pneg %p55
      $region22: #{tpu_custom_call.1} parent=15 // pred_check_branch
        %144 = sbr.rel (%p142) target = $region24
      $region23: #{tpu_custom_call.1} parent=15 // pred_region
        %s145 = smul.u32 66, %s9
        %p146 = scmp.lt.s32.totalorder %s145, 131
        %s147 = scalar_select %p146, %s145, 131
        %s148 = smul.addr %s147, 8
        %s149 = scalar_lea.vmem %s1, %s148
        %s150 = smul.u32 66, %s9
      $region24: #{tpu_custom_call.1} parent=15 // pred_fallthru
        _
      // Predicated region
      $region25: #{tpu_custom_call.1} parent=15 // pred_check
        %p151 = pneg %p81
      $region26: #{tpu_custom_call.1} parent=15 // pred_check_branch
        %153 = sbr.rel (%p151) target = $region28
      $region27: #{tpu_custom_call.1} parent=15 // pred_region
        %s154 = smul.u32 66, %s9
        %p155 = scmp.lt.s32.totalorder %s154, 131
        %s156 = scalar_select %p155, %s154, 131
        %s157 = smul.addr %s156, 8
        %s158 = scalar_lea.vmem %s2, %s157
        %s159 = smul.u32 66, %s9
      $region28: #{tpu_custom_call.1} parent=15 // pred_fallthru
        _
    $region16: #{tpu_custom_call.1} parent=5 // pred_fallthru
      _
    %p160 = scmp.le.s32.totalorder 1, %s9
    %p161 = scmp.lt.s32.totalorder %s9, 3
    %p162 = pnand %p160, %p161
    %p163 = pneg %p162
    // Predicated region
    $region29: #{tpu_custom_call.1} parent=5 // pred_check
      _
    $region30: #{tpu_custom_call.1} parent=5 // pred_check_branch
      %165 = sbr.rel (%p162) target = $region32
    $region31: #{tpu_custom_call.1} parent=5 // pred_region
      %s166 = ssub.s32 %s9, 1
      %s167 = smul.u32 66, %s14
      %p168 = scmp.lt.s32.totalorder %s167, 131
      %s169 = scalar_select %p168, %s167, 131
      %s170 = smul.addr %s169, 2
      %s171 = smul.addr %s170, 8
      %s172 = scalar_lea.vmem %s0, %s171
      %p173 = pneg %p35
      %p174 = pneg %p32
      %s175 = smul.u32 66, %s14
      %p176 = scmp.lt.s32.totalorder %s175, 131
      %s177 = scalar_select %p176, %s175, 131
      %s178 = smul.addr %s177, 8
      %s179 = scalar_lea.vmem %s1, %s178
      %p180 = pneg %p61
      %p181 = pneg %p58
      %s182 = smul.u32 66, %s14
      %p183 = scmp.lt.s32.totalorder %s182, 131
      %s184 = scalar_select %p183, %s182, 131
      %s185 = smul.addr %s184, 8
      %s186 = scalar_lea.vmem %s2, %s185
      %p187 = pneg %p87
      %p188 = pneg %p84
      %p189 = pneg %p113
      %p190 = pneg %p110
      %s191 = smul.u32 66, %s14
      %p192 = scmp.lt.s32.totalorder %s191, 131
      %s193 = scalar_select %p192, %s191, 131
      %s194 = smul.addr %s193, 2
      %s195 = smul.addr %s194, 8
      %s196 = scalar_lea.vmem %s3, %s195
      %s197 = smul.u32 66, %s14
      %p198 = scmp.lt.s32.totalorder %s197, 131
      %s199 = scalar_select %p198, %s197, 131
      %s200 = smul.addr %s199, 2
      %s201 = smul.addr %s200, 8
      %s202 = scalar_lea.vmem %s0, %s201
      %s203 = smul.u32 66, %s14
      %s204 = smul.u32 66, %s14
      %p205 = scmp.lt.s32.totalorder %s204, 131
      %s206 = scalar_select %p205, %s204, 131
      %s207 = smul.addr %s206, 8
      %s208 = scalar_lea.vmem %s1, %s207
      %s209 = smul.u32 66, %s14
      %s210 = smul.u32 66, %s14
      %p211 = scmp.lt.s32.totalorder %s210, 131
      %s212 = scalar_select %p211, %s210, 131
      %s213 = smul.addr %s212, 8
      %s214 = scalar_lea.vmem %s2, %s213
      %s215 = smul.u32 66, %s14
      %s216 = smul.u32 66, %s14
      %p217 = scmp.lt.s32.totalorder %s216, 131
      %s218 = scalar_select %p217, %s216, 131
      %s219 = smul.addr %s218, 2
      %s220 = smul.addr %s219, 8
      %s221 = scalar_lea.vmem %s3, %s220
      %s222 = smul.u32 66, %s14
      %v223 = vld [vmem:[%s202] sm:$0xff]
      %v224 = vld [vmem:[%s202 + $0x8] sm:$0xff]
      %v225 = vld [vmem:[%s202 + $0x10] sm:$0xff]
      %v226 = vld [vmem:[%s202 + $0x18] sm:$0xff]
      %v227 = vld [vmem:[%s202 + $0x20] sm:$0xff]
      %v228 = vld [vmem:[%s202 + $0x28] sm:$0xff]
      %v229 = vld [vmem:[%s202 + $0x30] sm:$0xff]
      %v230 = vld [vmem:[%s202 + $0x38] sm:$0xff]
      %v231 = vld [vmem:[%s202 + $0x40] sm:$0xff]
      %v232 = vld [vmem:[%s202 + $0x48] sm:$0xff]
      %v233 = vld [vmem:[%s202 + $0x50] sm:$0xff]
      %v234 = vld [vmem:[%s202 + $0x58] sm:$0xff]
      %v235 = vld [vmem:[%s202 + $0x60] sm:$0xff]
      %v236 = vld [vmem:[%s202 + $0x68] sm:$0xff]
      %v237 = vld [vmem:[%s202 + $0x70] sm:$0xff]
      %v238 = vld [vmem:[%s202 + $0x78] sm:$0xff]
      %v239 = vld [vmem:[%s202 + $0x80] sm:$0xff]
      %v240 = vld [vmem:[%s202 + $0x88] sm:$0xff]
      %v241 = vld [vmem:[%s202 + $0x90] sm:$0xff]
      %v242 = vld [vmem:[%s202 + $0x98] sm:$0xff]
      %v243 = vld [vmem:[%s202 + $0xa0] sm:$0xff]
      %v244 = vld [vmem:[%s202 + $0xa8] sm:$0xff]
      %v245 = vld [vmem:[%s202 + $0xb0] sm:$0xff]
      %v246 = vld [vmem:[%s202 + $0xb8] sm:$0xff]
      %v247 = vld [vmem:[%s202 + $0xc0] sm:$0xff]
      %v248 = vld [vmem:[%s202 + $0xc8] sm:$0xff]
      %v249 = vld [vmem:[%s202 + $0xd0] sm:$0xff]
      %v250 = vld [vmem:[%s202 + $0xd8] sm:$0xff]
      %v251 = vld [vmem:[%s202 + $0xe0] sm:$0xff]
      %v252 = vld [vmem:[%s202 + $0xe8] sm:$0xff]
      %v253 = vld [vmem:[%s202 + $0xf0] sm:$0xff]
      %v254 = vld [vmem:[%s202 + $0xf8] sm:$0xff]
      %v255 = vld [vmem:[%s202 + $0x100] sm:$0xff]
      %v256 = vld [vmem:[%s202 + $0x108] sm:$0xff]
      %v257 = vld [vmem:[%s202 + $0x110] sm:$0xff]
      %v258 = vld [vmem:[%s202 + $0x118] sm:$0xff]
      %v259 = vld [vmem:[%s202 + $0x120] sm:$0xff]
      %v260 = vld [vmem:[%s202 + $0x128] sm:$0xff]
      %v261 = vld [vmem:[%s202 + $0x130] sm:$0xff]
      %v262 = vld [vmem:[%s202 + $0x138] sm:$0xff]
      %v263 = vld [vmem:[%s202 + $0x140] sm:$0xff]
      %v264 = vld [vmem:[%s202 + $0x148] sm:$0xff]
      %v265 = vld [vmem:[%s202 + $0x150] sm:$0xff]
      %v266 = vld [vmem:[%s202 + $0x158] sm:$0xff]
      %v267 = vld [vmem:[%s202 + $0x160] sm:$0xff]
      %v268 = vld [vmem:[%s202 + $0x168] sm:$0xff]
      %v269 = vld [vmem:[%s202 + $0x170] sm:$0xff]
      %v270 = vld [vmem:[%s202 + $0x178] sm:$0xff]
      %v271 = vld [vmem:[%s202 + $0x180] sm:$0xff]
      %v272 = vld [vmem:[%s202 + $0x188] sm:$0xff]
      %v273 = vld [vmem:[%s202 + $0x190] sm:$0xff]
      %v274 = vld [vmem:[%s202 + $0x198] sm:$0xff]
      %v275 = vld [vmem:[%s202 + $0x1a0] sm:$0xff]
      %v276 = vld [vmem:[%s202 + $0x1a8] sm:$0xff]
      %v277 = vld [vmem:[%s202 + $0x1b0] sm:$0xff]
      %v278 = vld [vmem:[%s202 + $0x1b8] sm:$0xff]
      %v279 = vld [vmem:[%s202 + $0x1c0] sm:$0xff]
      %v280 = vld [vmem:[%s202 + $0x1c8] sm:$0xff]
      %v281 = vld [vmem:[%s202 + $0x1d0] sm:$0xff]
      %v282 = vld [vmem:[%s202 + $0x1d8] sm:$0xff]
      %v283 = vld [vmem:[%s202 + $0x1e0] sm:$0xff]
      %v284 = vld [vmem:[%s202 + $0x1e8] sm:$0xff]
      %v285 = vld [vmem:[%s202 + $0x1f0] sm:$0xff]
      %v286 = vld [vmem:[%s202 + $0x1f8] sm:$0xff]
      %v287 = vld [vmem:[%s202 + $0x200] sm:$0xff]
      %v288 = vld [vmem:[%s202 + $0x208] sm:$0xff]
      %v289 = vld [vmem:[%s202 + $0x210] sm:$0xff]
      %v290 = vld [vmem:[%s202 + $0x218] sm:$0xff]
      %v291 = vld [vmem:[%s202 + $0x220] sm:$0xff]
      %v292 = vld [vmem:[%s202 + $0x228] sm:$0xff]
      %v293 = vld [vmem:[%s202 + $0x230] sm:$0xff]
      %v294 = vld [vmem:[%s202 + $0x238] sm:$0xff]
      %v295 = vld [vmem:[%s202 + $0x240] sm:$0xff]
      %v296 = vld [vmem:[%s202 + $0x248] sm:$0xff]
      %v297 = vld [vmem:[%s202 + $0x250] sm:$0xff]
      %v298 = vld [vmem:[%s202 + $0x258] sm:$0xff]
      %v299 = vld [vmem:[%s202 + $0x260] sm:$0xff]
      %v300 = vld [vmem:[%s202 + $0x268] sm:$0xff]
      %v301 = vld [vmem:[%s202 + $0x270] sm:$0xff]
      %v302 = vld [vmem:[%s202 + $0x278] sm:$0xff]
      %v303 = vld [vmem:[%s202 + $0x280] sm:$0xff]
      %v304 = vld [vmem:[%s202 + $0x288] sm:$0xff]
      %v305 = vld [vmem:[%s202 + $0x290] sm:$0xff]
      %v306 = vld [vmem:[%s202 + $0x298] sm:$0xff]
      %v307 = vld [vmem:[%s202 + $0x2a0] sm:$0xff]
      %v308 = vld [vmem:[%s202 + $0x2a8] sm:$0xff]
      %v309 = vld [vmem:[%s202 + $0x2b0] sm:$0xff]
      %v310 = vld [vmem:[%s202 + $0x2b8] sm:$0xff]
      %v311 = vld [vmem:[%s202 + $0x2c0] sm:$0xff]
      %v312 = vld [vmem:[%s202 + $0x2c8] sm:$0xff]
      %v313 = vld [vmem:[%s202 + $0x2d0] sm:$0xff]
      %v314 = vld [vmem:[%s202 + $0x2d8] sm:$0xff]
      %v315 = vld [vmem:[%s202 + $0x2e0] sm:$0xff]
      %v316 = vld [vmem:[%s202 + $0x2e8] sm:$0xff]
      %v317 = vld [vmem:[%s202 + $0x2f0] sm:$0xff]
      %v318 = vld [vmem:[%s202 + $0x2f8] sm:$0xff]
      %v319 = vld [vmem:[%s202 + $0x300] sm:$0xff]
      %v320 = vld [vmem:[%s202 + $0x308] sm:$0xff]
      %v321 = vld [vmem:[%s202 + $0x310] sm:$0xff]
      %v322 = vld [vmem:[%s202 + $0x318] sm:$0xff]
      %v323 = vld [vmem:[%s202 + $0x320] sm:$0xff]
      %v324 = vld [vmem:[%s202 + $0x328] sm:$0xff]
      %v325 = vld [vmem:[%s202 + $0x330] sm:$0xff]
      %v326 = vld [vmem:[%s202 + $0x338] sm:$0xff]
      %v327 = vld [vmem:[%s202 + $0x340] sm:$0xff]
      %v328 = vld [vmem:[%s202 + $0x348] sm:$0xff]
      %v329 = vld [vmem:[%s202 + $0x350] sm:$0xff]
      %v330 = vld [vmem:[%s202 + $0x358] sm:$0xff]
      %v331 = vld [vmem:[%s202 + $0x360] sm:$0xff]
      %v332 = vld [vmem:[%s202 + $0x368] sm:$0xff]
      %v333 = vld [vmem:[%s202 + $0x370] sm:$0xff]
      %v334 = vld [vmem:[%s202 + $0x378] sm:$0xff]
      %v335 = vld [vmem:[%s202 + $0x380] sm:$0xff]
      %v336 = vld [vmem:[%s202 + $0x388] sm:$0xff]
      %v337 = vld [vmem:[%s202 + $0x390] sm:$0xff]
      %v338 = vld [vmem:[%s202 + $0x398] sm:$0xff]
      %v339 = vld [vmem:[%s202 + $0x3a0] sm:$0xff]
      %v340 = vld [vmem:[%s202 + $0x3a8] sm:$0xff]
      %v341 = vld [vmem:[%s202 + $0x3b0] sm:$0xff]
      %v342 = vld [vmem:[%s202 + $0x3b8] sm:$0xff]
      %v343 = vld [vmem:[%s202 + $0x3c0] sm:$0xff]
      %v344 = vld [vmem:[%s202 + $0x3c8] sm:$0xff]
      %v345 = vld [vmem:[%s202 + $0x3d0] sm:$0xff]
      %v346 = vld [vmem:[%s202 + $0x3d8] sm:$0xff]
      %v347 = vld [vmem:[%s202 + $0x3e0] sm:$0xff]
      %v348 = vld [vmem:[%s202 + $0x3e8] sm:$0xff]
      %v349 = vld [vmem:[%s202 + $0x3f0] sm:$0xff]
      %v350 = vld [vmem:[%s202 + $0x3f8] sm:$0xff]
      %v351 = vld [vmem:[%s202 + $0x400] sm:$0xff]
      %v352 = vld [vmem:[%s202 + $0x408] sm:$0xff]
      %v353 = vld [vmem:[%s202 + $0x410] sm:$0xff]
      %v354 = vld [vmem:[%s202 + $0x418] sm:$0xff]
      %vm355 = vcmask 556032
      %v356 = vsel %vm355, %v224, 0.0
      %v357 = vadd.f32 %v223, %v356
      %358 = vadd.xlane.f32.xlu0 %v357
      %v359 = vpop.xlane.xlu0 %358
      %v360 = vsel %vm355, %v226, 0.0
      %v361 = vadd.f32 %v225, %v360
      %362 = vadd.xlane.f32.xlu0 %v361
      %v363 = vpop.xlane.xlu0 %362
      %v364 = vsel %vm355, %v228, 0.0
      %v365 = vadd.f32 %v227, %v364
      %366 = vadd.xlane.f32.xlu0 %v365
      %v367 = vpop.xlane.xlu0 %366
      %v368 = vsel %vm355, %v230, 0.0
      %v369 = vadd.f32 %v229, %v368
      %370 = vadd.xlane.f32.xlu0 %v369
      %v371 = vpop.xlane.xlu0 %370
      %v372 = vsel %vm355, %v232, 0.0
      %v373 = vadd.f32 %v231, %v372
      %374 = vadd.xlane.f32.xlu0 %v373
      %v375 = vpop.xlane.xlu0 %374
      %v376 = vsel %vm355, %v234, 0.0
      %v377 = vadd.f32 %v233, %v376
      %378 = vadd.xlane.f32.xlu0 %v377
      %v379 = vpop.xlane.xlu0 %378
      %v380 = vsel %vm355, %v236, 0.0
      %v381 = vadd.f32 %v235, %v380
      %382 = vadd.xlane.f32.xlu0 %v381
      %v383 = vpop.xlane.xlu0 %382
      %v384 = vsel %vm355, %v238, 0.0
      %v385 = vadd.f32 %v237, %v384
      %386 = vadd.xlane.f32.xlu0 %v385
      %v387 = vpop.xlane.xlu0 %386
      %v388 = vsel %vm355, %v240, 0.0
      %v389 = vadd.f32 %v239, %v388
      %390 = vadd.xlane.f32.xlu0 %v389
      %v391 = vpop.xlane.xlu0 %390
      %v392 = vsel %vm355, %v242, 0.0
      %v393 = vadd.f32 %v241, %v392
      %394 = vadd.xlane.f32.xlu0 %v393
      %v395 = vpop.xlane.xlu0 %394
      %v396 = vsel %vm355, %v244, 0.0
      %v397 = vadd.f32 %v243, %v396
      %398 = vadd.xlane.f32.xlu0 %v397
      %v399 = vpop.xlane.xlu0 %398
      %v400 = vsel %vm355, %v246, 0.0
      %v401 = vadd.f32 %v245, %v400
      %402 = vadd.xlane.f32.xlu0 %v401
      %v403 = vpop.xlane.xlu0 %402
      %v404 = vsel %vm355, %v248, 0.0
      %v405 = vadd.f32 %v247, %v404
      %406 = vadd.xlane.f32.xlu0 %v405
      %v407 = vpop.xlane.xlu0 %406
      %v408 = vsel %vm355, %v250, 0.0
      %v409 = vadd.f32 %v249, %v408
      %410 = vadd.xlane.f32.xlu0 %v409
      %v411 = vpop.xlane.xlu0 %410
      %v412 = vsel %vm355, %v252, 0.0
      %v413 = vadd.f32 %v251, %v412
      %414 = vadd.xlane.f32.xlu0 %v413
      %v415 = vpop.xlane.xlu0 %414
      %v416 = vsel %vm355, %v254, 0.0
      %v417 = vadd.f32 %v253, %v416
      %418 = vadd.xlane.f32.xlu0 %v417
      %v419 = vpop.xlane.xlu0 %418
      %v420 = vsel %vm355, %v256, 0.0
      %v421 = vadd.f32 %v255, %v420
      %422 = vadd.xlane.f32.xlu0 %v421
      %v423 = vpop.xlane.xlu0 %422
      %v424 = vsel %vm355, %v258, 0.0
      %v425 = vadd.f32 %v257, %v424
      %426 = vadd.xlane.f32.xlu0 %v425
      %v427 = vpop.xlane.xlu0 %426
      %v428 = vsel %vm355, %v260, 0.0
      %v429 = vadd.f32 %v259, %v428
      %430 = vadd.xlane.f32.xlu0 %v429
      %v431 = vpop.xlane.xlu0 %430
      %v432 = vsel %vm355, %v262, 0.0
      %v433 = vadd.f32 %v261, %v432
      %434 = vadd.xlane.f32.xlu0 %v433
      %v435 = vpop.xlane.xlu0 %434
      %v436 = vsel %vm355, %v264, 0.0
      %v437 = vadd.f32 %v263, %v436
      %438 = vadd.xlane.f32.xlu0 %v437
      %v439 = vpop.xlane.xlu0 %438
      %v440 = vsel %vm355, %v266, 0.0
      %v441 = vadd.f32 %v265, %v440
      %442 = vadd.xlane.f32.xlu0 %v441
      %v443 = vpop.xlane.xlu0 %442
      %v444 = vsel %vm355, %v268, 0.0
      %v445 = vadd.f32 %v267, %v444
      %446 = vadd.xlane.f32.xlu0 %v445
      %v447 = vpop.xlane.xlu0 %446
      %v448 = vsel %vm355, %v270, 0.0
      %v449 = vadd.f32 %v269, %v448
      %450 = vadd.xlane.f32.xlu0 %v449
      %v451 = vpop.xlane.xlu0 %450
      %v452 = vsel %vm355, %v272, 0.0
      %v453 = vadd.f32 %v271, %v452
      %454 = vadd.xlane.f32.xlu0 %v453
      %v455 = vpop.xlane.xlu0 %454
      %v456 = vsel %vm355, %v274, 0.0
      %v457 = vadd.f32 %v273, %v456
      %458 = vadd.xlane.f32.xlu0 %v457
      %v459 = vpop.xlane.xlu0 %458
      %v460 = vsel %vm355, %v276, 0.0
      %v461 = vadd.f32 %v275, %v460
      %462 = vadd.xlane.f32.xlu0 %v461
      %v463 = vpop.xlane.xlu0 %462
      %v464 = vsel %vm355, %v278, 0.0
      %v465 = vadd.f32 %v277, %v464
      %466 = vadd.xlane.f32.xlu0 %v465
      %v467 = vpop.xlane.xlu0 %466
      %v468 = vsel %vm355, %v280, 0.0
      %v469 = vadd.f32 %v279, %v468
      %470 = vadd.xlane.f32.xlu0 %v469
      %v471 = vpop.xlane.xlu0 %470
      %v472 = vsel %vm355, %v282, 0.0
      %v473 = vadd.f32 %v281, %v472
      %474 = vadd.xlane.f32.xlu0 %v473
      %v475 = vpop.xlane.xlu0 %474
      %v476 = vsel %vm355, %v284, 0.0
      %v477 = vadd.f32 %v283, %v476
      %478 = vadd.xlane.f32.xlu0 %v477
      %v479 = vpop.xlane.xlu0 %478
      %v480 = vsel %vm355, %v286, 0.0
      %v481 = vadd.f32 %v285, %v480
      %482 = vadd.xlane.f32.xlu0 %v481
      %v483 = vpop.xlane.xlu0 %482
      %v484 = vsel %vm355, %v288, 0.0
      %v485 = vadd.f32 %v287, %v484
      %486 = vadd.xlane.f32.xlu0 %v485
      %v487 = vpop.xlane.xlu0 %486
      %v488 = vsel %vm355, %v290, 0.0
      %v489 = vadd.f32 %v289, %v488
      %490 = vadd.xlane.f32.xlu0 %v489
      %v491 = vpop.xlane.xlu0 %490
      %v492 = vsel %vm355, %v292, 0.0
      %v493 = vadd.f32 %v291, %v492
      %494 = vadd.xlane.f32.xlu0 %v493
      %v495 = vpop.xlane.xlu0 %494
      %v496 = vsel %vm355, %v294, 0.0
      %v497 = vadd.f32 %v293, %v496
      %498 = vadd.xlane.f32.xlu0 %v497
      %v499 = vpop.xlane.xlu0 %498
      %v500 = vsel %vm355, %v296, 0.0
      %v501 = vadd.f32 %v295, %v500
      %502 = vadd.xlane.f32.xlu0 %v501
      %v503 = vpop.xlane.xlu0 %502
      %v504 = vsel %vm355, %v298, 0.0
      %v505 = vadd.f32 %v297, %v504
      %506 = vadd.xlane.f32.xlu0 %v505
      %v507 = vpop.xlane.xlu0 %506
      %v508 = vsel %vm355, %v300, 0.0
      %v509 = vadd.f32 %v299, %v508
      %510 = vadd.xlane.f32.xlu0 %v509
      %v511 = vpop.xlane.xlu0 %510
      %v512 = vsel %vm355, %v302, 0.0
      %v513 = vadd.f32 %v301, %v512
      %514 = vadd.xlane.f32.xlu0 %v513
      %v515 = vpop.xlane.xlu0 %514
      %v516 = vsel %vm355, %v304, 0.0
      %v517 = vadd.f32 %v303, %v516
      %518 = vadd.xlane.f32.xlu0 %v517
      %v519 = vpop.xlane.xlu0 %518
      %v520 = vsel %vm355, %v306, 0.0
      %v521 = vadd.f32 %v305, %v520
      %522 = vadd.xlane.f32.xlu0 %v521
      %v523 = vpop.xlane.xlu0 %522
      %v524 = vsel %vm355, %v308, 0.0
      %v525 = vadd.f32 %v307, %v524
      %526 = vadd.xlane.f32.xlu0 %v525
      %v527 = vpop.xlane.xlu0 %526
      %v528 = vsel %vm355, %v310, 0.0
      %v529 = vadd.f32 %v309, %v528
      %530 = vadd.xlane.f32.xlu0 %v529
      %v531 = vpop.xlane.xlu0 %530
      %v532 = vsel %vm355, %v312, 0.0
      %v533 = vadd.f32 %v311, %v532
      %534 = vadd.xlane.f32.xlu0 %v533
      %v535 = vpop.xlane.xlu0 %534
      %v536 = vsel %vm355, %v314, 0.0
      %v537 = vadd.f32 %v313, %v536
      %538 = vadd.xlane.f32.xlu0 %v537
      %v539 = vpop.xlane.xlu0 %538
      %v540 = vsel %vm355, %v316, 0.0
      %v541 = vadd.f32 %v315, %v540
      %542 = vadd.xlane.f32.xlu0 %v541
      %v543 = vpop.xlane.xlu0 %542
      %v544 = vsel %vm355, %v318, 0.0
      %v545 = vadd.f32 %v317, %v544
      %546 = vadd.xlane.f32.xlu0 %v545
      %v547 = vpop.xlane.xlu0 %546
      %v548 = vsel %vm355, %v320, 0.0
      %v549 = vadd.f32 %v319, %v548
      %550 = vadd.xlane.f32.xlu0 %v549
      %v551 = vpop.xlane.xlu0 %550
      %v552 = vsel %vm355, %v322, 0.0
      %v553 = vadd.f32 %v321, %v552
      %554 = vadd.xlane.f32.xlu0 %v553
      %v555 = vpop.xlane.xlu0 %554
      %v556 = vsel %vm355, %v324, 0.0
      %v557 = vadd.f32 %v323, %v556
      %558 = vadd.xlane.f32.xlu0 %v557
      %v559 = vpop.xlane.xlu0 %558
      %v560 = vsel %vm355, %v326, 0.0
      %v561 = vadd.f32 %v325, %v560
      %562 = vadd.xlane.f32.xlu0 %v561
      %v563 = vpop.xlane.xlu0 %562
      %v564 = vsel %vm355, %v328, 0.0
      %v565 = vadd.f32 %v327, %v564
      %566 = vadd.xlane.f32.xlu0 %v565
      %v567 = vpop.xlane.xlu0 %566
      %v568 = vsel %vm355, %v330, 0.0
      %v569 = vadd.f32 %v329, %v568
      %570 = vadd.xlane.f32.xlu0 %v569
      %v571 = vpop.xlane.xlu0 %570
      %v572 = vsel %vm355, %v332, 0.0
      %v573 = vadd.f32 %v331, %v572
      %574 = vadd.xlane.f32.xlu0 %v573
      %v575 = vpop.xlane.xlu0 %574
      %v576 = vsel %vm355, %v334, 0.0
      %v577 = vadd.f32 %v333, %v576
      %578 = vadd.xlane.f32.xlu0 %v577
      %v579 = vpop.xlane.xlu0 %578
      %v580 = vsel %vm355, %v336, 0.0
      %v581 = vadd.f32 %v335, %v580
      %582 = vadd.xlane.f32.xlu0 %v581
      %v583 = vpop.xlane.xlu0 %582
      %v584 = vsel %vm355, %v338, 0.0
      %v585 = vadd.f32 %v337, %v584
      %586 = vadd.xlane.f32.xlu0 %v585
      %v587 = vpop.xlane.xlu0 %586
      %v588 = vsel %vm355, %v340, 0.0
      %v589 = vadd.f32 %v339, %v588
      %590 = vadd.xlane.f32.xlu0 %v589
      %v591 = vpop.xlane.xlu0 %590
      %v592 = vsel %vm355, %v342, 0.0
      %v593 = vadd.f32 %v341, %v592
      %594 = vadd.xlane.f32.xlu0 %v593
      %v595 = vpop.xlane.xlu0 %594
      %v596 = vsel %vm355, %v344, 0.0
      %v597 = vadd.f32 %v343, %v596
      %598 = vadd.xlane.f32.xlu0 %v597
      %v599 = vpop.xlane.xlu0 %598
      %v600 = vsel %vm355, %v346, 0.0
      %v601 = vadd.f32 %v345, %v600
      %602 = vadd.xlane.f32.xlu0 %v601
      %v603 = vpop.xlane.xlu0 %602
      %v604 = vsel %vm355, %v348, 0.0
      %v605 = vadd.f32 %v347, %v604
      %606 = vadd.xlane.f32.xlu0 %v605
      %v607 = vpop.xlane.xlu0 %606
      %v608 = vsel %vm355, %v350, 0.0
      %v609 = vadd.f32 %v349, %v608
      %610 = vadd.xlane.f32.xlu0 %v609
      %v611 = vpop.xlane.xlu0 %610
      %v612 = vsel %vm355, %v352, 0.0
      %v613 = vadd.f32 %v351, %v612
      %614 = vadd.xlane.f32.xlu0 %v613
      %v615 = vpop.xlane.xlu0 %614
      %v616 = vsel %vm355, %v354, 0.0
      %v617 = vadd.f32 %v353, %v616
      %618 = vadd.xlane.f32.xlu0 %v617
      %v619 = vpop.xlane.xlu0 %618
      %v620 = vmul.f32 %v223, %v223
      %v621 = vmul.f32 %v224, %v224
      %v622 = vmul.f32 %v225, %v225
      %v623 = vmul.f32 %v226, %v226
      %v624 = vmul.f32 %v227, %v227
      %v625 = vmul.f32 %v228, %v228
      %v626 = vmul.f32 %v229, %v229
      %v627 = vmul.f32 %v230, %v230
      %v628 = vmul.f32 %v231, %v231
      %v629 = vmul.f32 %v232, %v232
      %v630 = vmul.f32 %v233, %v233
      %v631 = vmul.f32 %v234, %v234
      %v632 = vmul.f32 %v235, %v235
      %v633 = vmul.f32 %v236, %v236
      %v634 = vmul.f32 %v237, %v237
      %v635 = vmul.f32 %v238, %v238
      %v636 = vmul.f32 %v239, %v239
      %v637 = vmul.f32 %v240, %v240
      %v638 = vmul.f32 %v241, %v241
      %v639 = vmul.f32 %v242, %v242
      %v640 = vmul.f32 %v243, %v243
      %v641 = vmul.f32 %v244, %v244
      %v642 = vmul.f32 %v245, %v245
      %v643 = vmul.f32 %v246, %v246
      %v644 = vmul.f32 %v247, %v247
      %v645 = vmul.f32 %v248, %v248
      %v646 = vmul.f32 %v249, %v249
      %v647 = vmul.f32 %v250, %v250
      %v648 = vmul.f32 %v251, %v251
      %v649 = vmul.f32 %v252, %v252
      %v650 = vmul.f32 %v253, %v253
      %v651 = vmul.f32 %v254, %v254
      %v652 = vmul.f32 %v255, %v255
      %v653 = vmul.f32 %v256, %v256
      %v654 = vmul.f32 %v257, %v257
      %v655 = vmul.f32 %v258, %v258
      %v656 = vmul.f32 %v259, %v259
      %v657 = vmul.f32 %v260, %v260
      %v658 = vmul.f32 %v261, %v261
      %v659 = vmul.f32 %v262, %v262
      %v660 = vmul.f32 %v263, %v263
      %v661 = vmul.f32 %v264, %v264
      %v662 = vmul.f32 %v265, %v265
      %v663 = vmul.f32 %v266, %v266
      %v664 = vmul.f32 %v267, %v267
      %v665 = vmul.f32 %v268, %v268
      %v666 = vmul.f32 %v269, %v269
      %v667 = vmul.f32 %v270, %v270
      %v668 = vmul.f32 %v271, %v271
      %v669 = vmul.f32 %v272, %v272
      %v670 = vmul.f32 %v273, %v273
      %v671 = vmul.f32 %v274, %v274
      %v672 = vmul.f32 %v275, %v275
      %v673 = vmul.f32 %v276, %v276
      %v674 = vmul.f32 %v277, %v277
      %v675 = vmul.f32 %v278, %v278
      %v676 = vmul.f32 %v279, %v279
      %v677 = vmul.f32 %v280, %v280
      %v678 = vmul.f32 %v281, %v281
      %v679 = vmul.f32 %v282, %v282
      %v680 = vmul.f32 %v283, %v283
      %v681 = vmul.f32 %v284, %v284
      %v682 = vmul.f32 %v285, %v285
      %v683 = vmul.f32 %v286, %v286
      %v684 = vmul.f32 %v287, %v287
      %v685 = vmul.f32 %v288, %v288
      %v686 = vmul.f32 %v289, %v289
      %v687 = vmul.f32 %v290, %v290
      %v688 = vmul.f32 %v291, %v291
      %v689 = vmul.f32 %v292, %v292
      %v690 = vmul.f32 %v293, %v293
      %v691 = vmul.f32 %v294, %v294
      %v692 = vmul.f32 %v295, %v295
      %v693 = vmul.f32 %v296, %v296
      %v694 = vmul.f32 %v297, %v297
      %v695 = vmul.f32 %v298, %v298
      %v696 = vmul.f32 %v299, %v299
      %v697 = vmul.f32 %v300, %v300
      %v698 = vmul.f32 %v301, %v301
      %v699 = vmul.f32 %v302, %v302
      %v700 = vmul.f32 %v303, %v303
      %v701 = vmul.f32 %v304, %v304
      %v702 = vmul.f32 %v305, %v305
      %v703 = vmul.f32 %v306, %v306
      %v704 = vmul.f32 %v307, %v307
      %v705 = vmul.f32 %v308, %v308
      %v706 = vmul.f32 %v309, %v309
      %v707 = vmul.f32 %v310, %v310
      %v708 = vmul.f32 %v311, %v311
      %v709 = vmul.f32 %v312, %v312
      %v710 = vmul.f32 %v313, %v313
      %v711 = vmul.f32 %v314, %v314
      %v712 = vmul.f32 %v315, %v315
      %v713 = vmul.f32 %v316, %v316
      %v714 = vmul.f32 %v317, %v317
      %v715 = vmul.f32 %v318, %v318
      %v716 = vmul.f32 %v319, %v319
      %v717 = vmul.f32 %v320, %v320
      %v718 = vmul.f32 %v321, %v321
      %v719 = vmul.f32 %v322, %v322
      %v720 = vmul.f32 %v323, %v323
      %v721 = vmul.f32 %v324, %v324
      %v722 = vmul.f32 %v325, %v325
      %v723 = vmul.f32 %v326, %v326
      %v724 = vmul.f32 %v327, %v327
      %v725 = vmul.f32 %v328, %v328
      %v726 = vmul.f32 %v329, %v329
      %v727 = vmul.f32 %v330, %v330
      %v728 = vmul.f32 %v331, %v331
      %v729 = vmul.f32 %v332, %v332
      %v730 = vmul.f32 %v333, %v333
      %v731 = vmul.f32 %v334, %v334
      %v732 = vmul.f32 %v335, %v335
      %v733 = vmul.f32 %v336, %v336
      %v734 = vmul.f32 %v337, %v337
      %v735 = vmul.f32 %v338, %v338
      %v736 = vmul.f32 %v339, %v339
      %v737 = vmul.f32 %v340, %v340
      %v738 = vmul.f32 %v341, %v341
      %v739 = vmul.f32 %v342, %v342
      %v740 = vmul.f32 %v343, %v343
      %v741 = vmul.f32 %v344, %v344
      %v742 = vmul.f32 %v345, %v345
      %v743 = vmul.f32 %v346, %v346
      %v744 = vmul.f32 %v347, %v347
      %v745 = vmul.f32 %v348, %v348
      %v746 = vmul.f32 %v349, %v349
      %v747 = vmul.f32 %v350, %v350
      %v748 = vmul.f32 %v351, %v351
      %v749 = vmul.f32 %v352, %v352
      %v750 = vmul.f32 %v353, %v353
      %v751 = vmul.f32 %v354, %v354
      %v752 = vsel %vm355, %v621, 0.0
      %v753 = vadd.f32 %v620, %v752
      %754 = vadd.xlane.f32.xlu0 %v753
      %v755 = vpop.xlane.xlu0 %754
      %v756 = vsel %vm355, %v623, 0.0
      %v757 = vadd.f32 %v622, %v756
      %758 = vadd.xlane.f32.xlu0 %v757
      %v759 = vpop.xlane.xlu0 %758
      %v760 = vsel %vm355, %v625, 0.0
      %v761 = vadd.f32 %v624, %v760
      %762 = vadd.xlane.f32.xlu0 %v761
      %v763 = vpop.xlane.xlu0 %762
      %v764 = vsel %vm355, %v627, 0.0
      %v765 = vadd.f32 %v626, %v764
      %766 = vadd.xlane.f32.xlu0 %v765
      %v767 = vpop.xlane.xlu0 %766
      %v768 = vsel %vm355, %v629, 0.0
      %v769 = vadd.f32 %v628, %v768
      %770 = vadd.xlane.f32.xlu0 %v769
      %v771 = vpop.xlane.xlu0 %770
      %v772 = vsel %vm355, %v631, 0.0
      %v773 = vadd.f32 %v630, %v772
      %774 = vadd.xlane.f32.xlu0 %v773
      %v775 = vpop.xlane.xlu0 %774
      %v776 = vsel %vm355, %v633, 0.0
      %v777 = vadd.f32 %v632, %v776
      %778 = vadd.xlane.f32.xlu0 %v777
      %v779 = vpop.xlane.xlu0 %778
      %v780 = vsel %vm355, %v635, 0.0
      %v781 = vadd.f32 %v634, %v780
      %782 = vadd.xlane.f32.xlu0 %v781
      %v783 = vpop.xlane.xlu0 %782
      %v784 = vsel %vm355, %v637, 0.0
      %v785 = vadd.f32 %v636, %v784
      %786 = vadd.xlane.f32.xlu0 %v785
      %v787 = vpop.xlane.xlu0 %786
      %v788 = vsel %vm355, %v639, 0.0
      %v789 = vadd.f32 %v638, %v788
      %790 = vadd.xlane.f32.xlu0 %v789
      %v791 = vpop.xlane.xlu0 %790
      %v792 = vsel %vm355, %v641, 0.0
      %v793 = vadd.f32 %v640, %v792
      %794 = vadd.xlane.f32.xlu0 %v793
      %v795 = vpop.xlane.xlu0 %794
      %v796 = vsel %vm355, %v643, 0.0
      %v797 = vadd.f32 %v642, %v796
      %798 = vadd.xlane.f32.xlu0 %v797
      %v799 = vpop.xlane.xlu0 %798
      %v800 = vsel %vm355, %v645, 0.0
      %v801 = vadd.f32 %v644, %v800
      %802 = vadd.xlane.f32.xlu0 %v801
      %v803 = vpop.xlane.xlu0 %802
      %v804 = vsel %vm355, %v647, 0.0
      %v805 = vadd.f32 %v646, %v804
      %806 = vadd.xlane.f32.xlu0 %v805
      %v807 = vpop.xlane.xlu0 %806
      %v808 = vsel %vm355, %v649, 0.0
      %v809 = vadd.f32 %v648, %v808
      %810 = vadd.xlane.f32.xlu0 %v809
      %v811 = vpop.xlane.xlu0 %810
      %v812 = vsel %vm355, %v651, 0.0
      %v813 = vadd.f32 %v650, %v812
      %814 = vadd.xlane.f32.xlu0 %v813
      %v815 = vpop.xlane.xlu0 %814
      %v816 = vsel %vm355, %v653, 0.0
      %v817 = vadd.f32 %v652, %v816
      %818 = vadd.xlane.f32.xlu0 %v817
      %v819 = vpop.xlane.xlu0 %818
      %v820 = vsel %vm355, %v655, 0.0
      %v821 = vadd.f32 %v654, %v820
      %822 = vadd.xlane.f32.xlu0 %v821
      %v823 = vpop.xlane.xlu0 %822
      %v824 = vsel %vm355, %v657, 0.0
      %v825 = vadd.f32 %v656, %v824
      %826 = vadd.xlane.f32.xlu0 %v825
      %v827 = vpop.xlane.xlu0 %826
      %v828 = vsel %vm355, %v659, 0.0
      %v829 = vadd.f32 %v658, %v828
      %830 = vadd.xlane.f32.xlu0 %v829
      %v831 = vpop.xlane.xlu0 %830
      %v832 = vsel %vm355, %v661, 0.0
      %v833 = vadd.f32 %v660, %v832
      %834 = vadd.xlane.f32.xlu0 %v833
      %v835 = vpop.xlane.xlu0 %834
      %v836 = vsel %vm355, %v663, 0.0
      %v837 = vadd.f32 %v662, %v836
      %838 = vadd.xlane.f32.xlu0 %v837
      %v839 = vpop.xlane.xlu0 %838
      %v840 = vsel %vm355, %v665, 0.0
      %v841 = vadd.f32 %v664, %v840
      %842 = vadd.xlane.f32.xlu0 %v841
      %v843 = vpop.xlane.xlu0 %842
      %v844 = vsel %vm355, %v667, 0.0
      %v845 = vadd.f32 %v666, %v844
      %846 = vadd.xlane.f32.xlu0 %v845
      %v847 = vpop.xlane.xlu0 %846
      %v848 = vsel %vm355, %v669, 0.0
      %v849 = vadd.f32 %v668, %v848
      %850 = vadd.xlane.f32.xlu0 %v849
      %v851 = vpop.xlane.xlu0 %850
      %v852 = vsel %vm355, %v671, 0.0
      %v853 = vadd.f32 %v670, %v852
      %854 = vadd.xlane.f32.xlu0 %v853
      %v855 = vpop.xlane.xlu0 %854
      %v856 = vsel %vm355, %v673, 0.0
      %v857 = vadd.f32 %v672, %v856
      %858 = vadd.xlane.f32.xlu0 %v857
      %v859 = vpop.xlane.xlu0 %858
      %v860 = vsel %vm355, %v675, 0.0
      %v861 = vadd.f32 %v674, %v860
      %862 = vadd.xlane.f32.xlu0 %v861
      %v863 = vpop.xlane.xlu0 %862
      %v864 = vsel %vm355, %v677, 0.0
      %v865 = vadd.f32 %v676, %v864
      %866 = vadd.xlane.f32.xlu0 %v865
      %v867 = vpop.xlane.xlu0 %866
      %v868 = vsel %vm355, %v679, 0.0
      %v869 = vadd.f32 %v678, %v868
      %870 = vadd.xlane.f32.xlu0 %v869
      %v871 = vpop.xlane.xlu0 %870
      %v872 = vsel %vm355, %v681, 0.0
      %v873 = vadd.f32 %v680, %v872
      %874 = vadd.xlane.f32.xlu0 %v873
      %v875 = vpop.xlane.xlu0 %874
      %v876 = vsel %vm355, %v683, 0.0
      %v877 = vadd.f32 %v682, %v876
      %878 = vadd.xlane.f32.xlu0 %v877
      %v879 = vpop.xlane.xlu0 %878
      %v880 = vsel %vm355, %v685, 0.0
      %v881 = vadd.f32 %v684, %v880
      %882 = vadd.xlane.f32.xlu0 %v881
      %v883 = vpop.xlane.xlu0 %882
      %v884 = vsel %vm355, %v687, 0.0
      %v885 = vadd.f32 %v686, %v884
      %886 = vadd.xlane.f32.xlu0 %v885
      %v887 = vpop.xlane.xlu0 %886
      %v888 = vsel %vm355, %v689, 0.0
      %v889 = vadd.f32 %v688, %v888
      %890 = vadd.xlane.f32.xlu0 %v889
      %v891 = vpop.xlane.xlu0 %890
      %v892 = vsel %vm355, %v691, 0.0
      %v893 = vadd.f32 %v690, %v892
      %894 = vadd.xlane.f32.xlu0 %v893
      %v895 = vpop.xlane.xlu0 %894
      %v896 = vsel %vm355, %v693, 0.0
      %v897 = vadd.f32 %v692, %v896
      %898 = vadd.xlane.f32.xlu0 %v897
      %v899 = vpop.xlane.xlu0 %898
      %v900 = vsel %vm355, %v695, 0.0
      %v901 = vadd.f32 %v694, %v900
      %902 = vadd.xlane.f32.xlu0 %v901
      %v903 = vpop.xlane.xlu0 %902
      %v904 = vsel %vm355, %v697, 0.0
      %v905 = vadd.f32 %v696, %v904
      %906 = vadd.xlane.f32.xlu0 %v905
      %v907 = vpop.xlane.xlu0 %906
      %v908 = vsel %vm355, %v699, 0.0
      %v909 = vadd.f32 %v698, %v908
      %910 = vadd.xlane.f32.xlu0 %v909
      %v911 = vpop.xlane.xlu0 %910
      %v912 = vsel %vm355, %v701, 0.0
      %v913 = vadd.f32 %v700, %v912
      %914 = vadd.xlane.f32.xlu0 %v913
      %v915 = vpop.xlane.xlu0 %914
      %v916 = vsel %vm355, %v703, 0.0
      %v917 = vadd.f32 %v702, %v916
      %918 = vadd.xlane.f32.xlu0 %v917
      %v919 = vpop.xlane.xlu0 %918
      %v920 = vsel %vm355, %v705, 0.0
      %v921 = vadd.f32 %v704, %v920
      %922 = vadd.xlane.f32.xlu0 %v921
      %v923 = vpop.xlane.xlu0 %922
      %v924 = vsel %vm355, %v707, 0.0
      %v925 = vadd.f32 %v706, %v924
      %926 = vadd.xlane.f32.xlu0 %v925
      %v927 = vpop.xlane.xlu0 %926
      %v928 = vsel %vm355, %v709, 0.0
      %v929 = vadd.f32 %v708, %v928
      %930 = vadd.xlane.f32.xlu0 %v929
      %v931 = vpop.xlane.xlu0 %930
      %v932 = vsel %vm355, %v711, 0.0
      %v933 = vadd.f32 %v710, %v932
      %934 = vadd.xlane.f32.xlu0 %v933
      %v935 = vpop.xlane.xlu0 %934
      %v936 = vsel %vm355, %v713, 0.0
      %v937 = vadd.f32 %v712, %v936
      %938 = vadd.xlane.f32.xlu0 %v937
      %v939 = vpop.xlane.xlu0 %938
      %v940 = vsel %vm355, %v715, 0.0
      %v941 = vadd.f32 %v714, %v940
      %942 = vadd.xlane.f32.xlu0 %v941
      %v943 = vpop.xlane.xlu0 %942
      %v944 = vsel %vm355, %v717, 0.0
      %v945 = vadd.f32 %v716, %v944
      %946 = vadd.xlane.f32.xlu0 %v945
      %v947 = vpop.xlane.xlu0 %946
      %v948 = vsel %vm355, %v719, 0.0
      %v949 = vadd.f32 %v718, %v948
      %950 = vadd.xlane.f32.xlu0 %v949
      %v951 = vpop.xlane.xlu0 %950
      %v952 = vsel %vm355, %v721, 0.0
      %v953 = vadd.f32 %v720, %v952
      %954 = vadd.xlane.f32.xlu0 %v953
      %v955 = vpop.xlane.xlu0 %954
      %v956 = vsel %vm355, %v723, 0.0
      %v957 = vadd.f32 %v722, %v956
      %958 = vadd.xlane.f32.xlu0 %v957
      %v959 = vpop.xlane.xlu0 %958
      %v960 = vsel %vm355, %v725, 0.0
      %v961 = vadd.f32 %v724, %v960
      %962 = vadd.xlane.f32.xlu0 %v961
      %v963 = vpop.xlane.xlu0 %962
      %v964 = vsel %vm355, %v727, 0.0
      %v965 = vadd.f32 %v726, %v964
      %966 = vadd.xlane.f32.xlu0 %v965
      %v967 = vpop.xlane.xlu0 %966
      %v968 = vsel %vm355, %v729, 0.0
      %v969 = vadd.f32 %v728, %v968
      %970 = vadd.xlane.f32.xlu0 %v969
      %v971 = vpop.xlane.xlu0 %970
      %v972 = vsel %vm355, %v731, 0.0
      %v973 = vadd.f32 %v730, %v972
      %974 = vadd.xlane.f32.xlu0 %v973
      %v975 = vpop.xlane.xlu0 %974
      %v976 = vsel %vm355, %v733, 0.0
      %v977 = vadd.f32 %v732, %v976
      %978 = vadd.xlane.f32.xlu0 %v977
      %v979 = vpop.xlane.xlu0 %978
      %v980 = vsel %vm355, %v735, 0.0
      %v981 = vadd.f32 %v734, %v980
      %982 = vadd.xlane.f32.xlu0 %v981
      %v983 = vpop.xlane.xlu0 %982
      %v984 = vsel %vm355, %v737, 0.0
      %v985 = vadd.f32 %v736, %v984
      %986 = vadd.xlane.f32.xlu0 %v985
      %v987 = vpop.xlane.xlu0 %986
      %v988 = vsel %vm355, %v739, 0.0
      %v989 = vadd.f32 %v738, %v988
      %990 = vadd.xlane.f32.xlu0 %v989
      %v991 = vpop.xlane.xlu0 %990
      %v992 = vsel %vm355, %v741, 0.0
      %v993 = vadd.f32 %v740, %v992
      %994 = vadd.xlane.f32.xlu0 %v993
      %v995 = vpop.xlane.xlu0 %994
      %v996 = vsel %vm355, %v743, 0.0
      %v997 = vadd.f32 %v742, %v996
      %998 = vadd.xlane.f32.xlu0 %v997
      %v999 = vpop.xlane.xlu0 %998
      %v1000 = vsel %vm355, %v745, 0.0
      %v1001 = vadd.f32 %v744, %v1000
      %1002 = vadd.xlane.f32.xlu0 %v1001
      %v1003 = vpop.xlane.xlu0 %1002
      %v1004 = vsel %vm355, %v747, 0.0
      %v1005 = vadd.f32 %v746, %v1004
      %1006 = vadd.xlane.f32.xlu0 %v1005
      %v1007 = vpop.xlane.xlu0 %1006
      %v1008 = vsel %vm355, %v749, 0.0
      %v1009 = vadd.f32 %v748, %v1008
      %1010 = vadd.xlane.f32.xlu0 %v1009
      %v1011 = vpop.xlane.xlu0 %1010
      %v1012 = vsel %vm355, %v751, 0.0
      %v1013 = vadd.f32 %v750, %v1012
      %1014 = vadd.xlane.f32.xlu0 %v1013
      %v1015 = vpop.xlane.xlu0 %1014
      %v1016 = vmul.f32 %v359, 0.0051020407
      %v1017 = vmul.f32 %v363, 0.0051020407
      %v1018 = vmul.f32 %v367, 0.0051020407
      %v1019 = vmul.f32 %v371, 0.0051020407
      %v1020 = vmul.f32 %v375, 0.0051020407
      %v1021 = vmul.f32 %v379, 0.0051020407
      %v1022 = vmul.f32 %v383, 0.0051020407
      %v1023 = vmul.f32 %v387, 0.0051020407
      %v1024 = vmul.f32 %v391, 0.0051020407
      %v1025 = vmul.f32 %v395, 0.0051020407
      %v1026 = vmul.f32 %v399, 0.0051020407
      %v1027 = vmul.f32 %v403, 0.0051020407
      %v1028 = vmul.f32 %v407, 0.0051020407
      %v1029 = vmul.f32 %v411, 0.0051020407
      %v1030 = vmul.f32 %v415, 0.0051020407
      %v1031 = vmul.f32 %v419, 0.0051020407
      %v1032 = vmul.f32 %v423, 0.0051020407
      %v1033 = vmul.f32 %v427, 0.0051020407
      %v1034 = vmul.f32 %v431, 0.0051020407
      %v1035 = vmul.f32 %v435, 0.0051020407
      %v1036 = vmul.f32 %v439, 0.0051020407
      %v1037 = vmul.f32 %v443, 0.0051020407
      %v1038 = vmul.f32 %v447, 0.0051020407
      %v1039 = vmul.f32 %v451, 0.0051020407
      %v1040 = vmul.f32 %v455, 0.0051020407
      %v1041 = vmul.f32 %v459, 0.0051020407
      %v1042 = vmul.f32 %v463, 0.0051020407
      %v1043 = vmul.f32 %v467, 0.0051020407
      %v1044 = vmul.f32 %v471, 0.0051020407
      %v1045 = vmul.f32 %v475, 0.0051020407
      %v1046 = vmul.f32 %v479, 0.0051020407
      %v1047 = vmul.f32 %v483, 0.0051020407
      %v1048 = vmul.f32 %v487, 0.0051020407
      %v1049 = vmul.f32 %v491, 0.0051020407
      %v1050 = vmul.f32 %v495, 0.0051020407
      %v1051 = vmul.f32 %v499, 0.0051020407
      %v1052 = vmul.f32 %v503, 0.0051020407
      %v1053 = vmul.f32 %v507, 0.0051020407
      %v1054 = vmul.f32 %v511, 0.0051020407
      %v1055 = vmul.f32 %v515, 0.0051020407
      %v1056 = vmul.f32 %v519, 0.0051020407
      %v1057 = vmul.f32 %v523, 0.0051020407
      %v1058 = vmul.f32 %v527, 0.0051020407
      %v1059 = vmul.f32 %v531, 0.0051020407
      %v1060 = vmul.f32 %v535, 0.0051020407
      %v1061 = vmul.f32 %v539, 0.0051020407
      %v1062 = vmul.f32 %v543, 0.0051020407
      %v1063 = vmul.f32 %v547, 0.0051020407
      %v1064 = vmul.f32 %v551, 0.0051020407
      %v1065 = vmul.f32 %v555, 0.0051020407
      %v1066 = vmul.f32 %v559, 0.0051020407
      %v1067 = vmul.f32 %v563, 0.0051020407
      %v1068 = vmul.f32 %v567, 0.0051020407
      %v1069 = vmul.f32 %v571, 0.0051020407
      %v1070 = vmul.f32 %v575, 0.0051020407
      %v1071 = vmul.f32 %v579, 0.0051020407
      %v1072 = vmul.f32 %v583, 0.0051020407
      %v1073 = vmul.f32 %v587, 0.0051020407
      %v1074 = vmul.f32 %v591, 0.0051020407
      %v1075 = vmul.f32 %v595, 0.0051020407
      %v1076 = vmul.f32 %v599, 0.0051020407
      %v1077 = vmul.f32 %v603, 0.0051020407
      %v1078 = vmul.f32 %v607, 0.0051020407
      %v1079 = vmul.f32 %v611, 0.0051020407
      %v1080 = vmul.f32 %v615, 0.0051020407
      %v1081 = vmul.f32 %v619, 0.0051020407
      %v1082 = vmul.f32 %v755, 0.0051020407
      %v1083 = vmul.f32 %v759, 0.0051020407
      %v1084 = vmul.f32 %v763, 0.0051020407
      %v1085 = vmul.f32 %v767, 0.0051020407
      %v1086 = vmul.f32 %v771, 0.0051020407
      %v1087 = vmul.f32 %v775, 0.0051020407
      %v1088 = vmul.f32 %v779, 0.0051020407
      %v1089 = vmul.f32 %v783, 0.0051020407
      %v1090 = vmul.f32 %v787, 0.0051020407
      %v1091 = vmul.f32 %v791, 0.0051020407
      %v1092 = vmul.f32 %v795, 0.0051020407
      %v1093 = vmul.f32 %v799, 0.0051020407
      %v1094 = vmul.f32 %v803, 0.0051020407
      %v1095 = vmul.f32 %v807, 0.0051020407
      %v1096 = vmul.f32 %v811, 0.0051020407
      %v1097 = vmul.f32 %v815, 0.0051020407
      %v1098 = vmul.f32 %v819, 0.0051020407
      %v1099 = vmul.f32 %v823, 0.0051020407
      %v1100 = vmul.f32 %v827, 0.0051020407
      %v1101 = vmul.f32 %v831, 0.0051020407
      %v1102 = vmul.f32 %v835, 0.0051020407
      %v1103 = vmul.f32 %v839, 0.0051020407
      %v1104 = vmul.f32 %v843, 0.0051020407
      %v1105 = vmul.f32 %v847, 0.0051020407
      %v1106 = vmul.f32 %v851, 0.0051020407
      %v1107 = vmul.f32 %v855, 0.0051020407
      %v1108 = vmul.f32 %v859, 0.0051020407
      %v1109 = vmul.f32 %v863, 0.0051020407
      %v1110 = vmul.f32 %v867, 0.0051020407
      %v1111 = vmul.f32 %v871, 0.0051020407
      %v1112 = vmul.f32 %v875, 0.0051020407
      %v1113 = vmul.f32 %v879, 0.0051020407
      %v1114 = vmul.f32 %v883, 0.0051020407
      %v1115 = vmul.f32 %v887, 0.0051020407
      %v1116 = vmul.f32 %v891, 0.0051020407
      %v1117 = vmul.f32 %v895, 0.0051020407
      %v1118 = vmul.f32 %v899, 0.0051020407
      %v1119 = vmul.f32 %v903, 0.0051020407
      %v1120 = vmul.f32 %v907, 0.0051020407
      %v1121 = vmul.f32 %v911, 0.0051020407
      %v1122 = vmul.f32 %v915, 0.0051020407
      %v1123 = vmul.f32 %v919, 0.0051020407
      %v1124 = vmul.f32 %v923, 0.0051020407
      %v1125 = vmul.f32 %v927, 0.0051020407
      %v1126 = vmul.f32 %v931, 0.0051020407
      %v1127 = vmul.f32 %v935, 0.0051020407
      %v1128 = vmul.f32 %v939, 0.0051020407
      %v1129 = vmul.f32 %v943, 0.0051020407
      %v1130 = vmul.f32 %v947, 0.0051020407
      %v1131 = vmul.f32 %v951, 0.0051020407
      %v1132 = vmul.f32 %v955, 0.0051020407
      %v1133 = vmul.f32 %v959, 0.0051020407
      %v1134 = vmul.f32 %v963, 0.0051020407
      %v1135 = vmul.f32 %v967, 0.0051020407
      %v1136 = vmul.f32 %v971, 0.0051020407
      %v1137 = vmul.f32 %v975, 0.0051020407
      %v1138 = vmul.f32 %v979, 0.0051020407
      %v1139 = vmul.f32 %v983, 0.0051020407
      %v1140 = vmul.f32 %v987, 0.0051020407
      %v1141 = vmul.f32 %v991, 0.0051020407
      %v1142 = vmul.f32 %v995, 0.0051020407
      %v1143 = vmul.f32 %v999, 0.0051020407
      %v1144 = vmul.f32 %v1003, 0.0051020407
      %v1145 = vmul.f32 %v1007, 0.0051020407
      %v1146 = vmul.f32 %v1011, 0.0051020407
      %v1147 = vmul.f32 %v1015, 0.0051020407
      %v1148 = vmul.f32 %v1016, %v1016
      %v1149 = vmul.f32 %v1017, %v1017
      %v1150 = vmul.f32 %v1018, %v1018
      %v1151 = vmul.f32 %v1019, %v1019
      %v1152 = vmul.f32 %v1020, %v1020
      %v1153 = vmul.f32 %v1021, %v1021
      %v1154 = vmul.f32 %v1022, %v1022
      %v1155 = vmul.f32 %v1023, %v1023
      %v1156 = vmul.f32 %v1024, %v1024
      %v1157 = vmul.f32 %v1025, %v1025
      %v1158 = vmul.f32 %v1026, %v1026
      %v1159 = vmul.f32 %v1027, %v1027
      %v1160 = vmul.f32 %v1028, %v1028
      %v1161 = vmul.f32 %v1029, %v1029
      %v1162 = vmul.f32 %v1030, %v1030
      %v1163 = vmul.f32 %v1031, %v1031
      %v1164 = vmul.f32 %v1032, %v1032
      %v1165 = vmul.f32 %v1033, %v1033
      %v1166 = vmul.f32 %v1034, %v1034
      %v1167 = vmul.f32 %v1035, %v1035
      %v1168 = vmul.f32 %v1036, %v1036
      %v1169 = vmul.f32 %v1037, %v1037
      %v1170 = vmul.f32 %v1038, %v1038
      %v1171 = vmul.f32 %v1039, %v1039
      %v1172 = vmul.f32 %v1040, %v1040
      %v1173 = vmul.f32 %v1041, %v1041
      %v1174 = vmul.f32 %v1042, %v1042
      %v1175 = vmul.f32 %v1043, %v1043
      %v1176 = vmul.f32 %v1044, %v1044
      %v1177 = vmul.f32 %v1045, %v1045
      %v1178 = vmul.f32 %v1046, %v1046
      %v1179 = vmul.f32 %v1047, %v1047
      %v1180 = vmul.f32 %v1048, %v1048
      %v1181 = vmul.f32 %v1049, %v1049
      %v1182 = vmul.f32 %v1050, %v1050
      %v1183 = vmul.f32 %v1051, %v1051
      %v1184 = vmul.f32 %v1052, %v1052
      %v1185 = vmul.f32 %v1053, %v1053
      %v1186 = vmul.f32 %v1054, %v1054
      %v1187 = vmul.f32 %v1055, %v1055
      %v1188 = vmul.f32 %v1056, %v1056
      %v1189 = vmul.f32 %v1057, %v1057
      %v1190 = vmul.f32 %v1058, %v1058
      %v1191 = vmul.f32 %v1059, %v1059
      %v1192 = vmul.f32 %v1060, %v1060
      %v1193 = vmul.f32 %v1061, %v1061
      %v1194 = vmul.f32 %v1062, %v1062
      %v1195 = vmul.f32 %v1063, %v1063
      %v1196 = vmul.f32 %v1064, %v1064
      %v1197 = vmul.f32 %v1065, %v1065
      %v1198 = vmul.f32 %v1066, %v1066
      %v1199 = vmul.f32 %v1067, %v1067
      %v1200 = vmul.f32 %v1068, %v1068
      %v1201 = vmul.f32 %v1069, %v1069
      %v1202 = vmul.f32 %v1070, %v1070
      %v1203 = vmul.f32 %v1071, %v1071
      %v1204 = vmul.f32 %v1072, %v1072
      %v1205 = vmul.f32 %v1073, %v1073
      %v1206 = vmul.f32 %v1074, %v1074
      %v1207 = vmul.f32 %v1075, %v1075
      %v1208 = vmul.f32 %v1076, %v1076
      %v1209 = vmul.f32 %v1077, %v1077
      %v1210 = vmul.f32 %v1078, %v1078
      %v1211 = vmul.f32 %v1079, %v1079
      %v1212 = vmul.f32 %v1080, %v1080
      %v1213 = vmul.f32 %v1081, %v1081
      %v1214 = vsub.f32 %v1082, %v1148
      %v1215 = vsub.f32 %v1083, %v1149
      %v1216 = vsub.f32 %v1084, %v1150
      %v1217 = vsub.f32 %v1085, %v1151
      %v1218 = vsub.f32 %v1086, %v1152
      %v1219 = vsub.f32 %v1087, %v1153
      %v1220 = vsub.f32 %v1088, %v1154
      %v1221 = vsub.f32 %v1089, %v1155
      %v1222 = vsub.f32 %v1090, %v1156
      %v1223 = vsub.f32 %v1091, %v1157
      %v1224 = vsub.f32 %v1092, %v1158
      %v1225 = vsub.f32 %v1093, %v1159
      %v1226 = vsub.f32 %v1094, %v1160
      %v1227 = vsub.f32 %v1095, %v1161
      %v1228 = vsub.f32 %v1096, %v1162
      %v1229 = vsub.f32 %v1097, %v1163
      %v1230 = vsub.f32 %v1098, %v1164
      %v1231 = vsub.f32 %v1099, %v1165
      %v1232 = vsub.f32 %v1100, %v1166
      %v1233 = vsub.f32 %v1101, %v1167
      %v1234 = vsub.f32 %v1102, %v1168
      %v1235 = vsub.f32 %v1103, %v1169
      %v1236 = vsub.f32 %v1104, %v1170
      %v1237 = vsub.f32 %v1105, %v1171
      %v1238 = vsub.f32 %v1106, %v1172
      %v1239 = vsub.f32 %v1107, %v1173
      %v1240 = vsub.f32 %v1108, %v1174
      %v1241 = vsub.f32 %v1109, %v1175
      %v1242 = vsub.f32 %v1110, %v1176
      %v1243 = vsub.f32 %v1111, %v1177
      %v1244 = vsub.f32 %v1112, %v1178
      %v1245 = vsub.f32 %v1113, %v1179
      %v1246 = vsub.f32 %v1114, %v1180
      %v1247 = vsub.f32 %v1115, %v1181
      %v1248 = vsub.f32 %v1116, %v1182
      %v1249 = vsub.f32 %v1117, %v1183
      %v1250 = vsub.f32 %v1118, %v1184
      %v1251 = vsub.f32 %v1119, %v1185
      %v1252 = vsub.f32 %v1120, %v1186
      %v1253 = vsub.f32 %v1121, %v1187
      %v1254 = vsub.f32 %v1122, %v1188
      %v1255 = vsub.f32 %v1123, %v1189
      %v1256 = vsub.f32 %v1124, %v1190
      %v1257 = vsub.f32 %v1125, %v1191
      %v1258 = vsub.f32 %v1126, %v1192
      %v1259 = vsub.f32 %v1127, %v1193
      %v1260 = vsub.f32 %v1128, %v1194
      %v1261 = vsub.f32 %v1129, %v1195
      %v1262 = vsub.f32 %v1130, %v1196
      %v1263 = vsub.f32 %v1131, %v1197
      %v1264 = vsub.f32 %v1132, %v1198
      %v1265 = vsub.f32 %v1133, %v1199
      %v1266 = vsub.f32 %v1134, %v1200
      %v1267 = vsub.f32 %v1135, %v1201
      %v1268 = vsub.f32 %v1136, %v1202
      %v1269 = vsub.f32 %v1137, %v1203
      %v1270 = vsub.f32 %v1138, %v1204
      %v1271 = vsub.f32 %v1139, %v1205
      %v1272 = vsub.f32 %v1140, %v1206
      %v1273 = vsub.f32 %v1141, %v1207
      %v1274 = vsub.f32 %v1142, %v1208
      %v1275 = vsub.f32 %v1143, %v1209
      %v1276 = vsub.f32 %v1144, %v1210
      %v1277 = vsub.f32 %v1145, %v1211
      %v1278 = vsub.f32 %v1146, %v1212
      %v1279 = vsub.f32 %v1147, %v1213
      %v1280 = vld [vmem:[%s208] sm:$0xff]
      %v1281 = vld [vmem:[%s208 + $0x8] sm:$0xff]
      %v1282 = vld [vmem:[%s208 + $0x10] sm:$0xff]
      %v1283 = vld [vmem:[%s208 + $0x18] sm:$0xff]
      %v1284 = vld [vmem:[%s208 + $0x20] sm:$0xff]
      %v1285 = vld [vmem:[%s208 + $0x28] sm:$0xff]
      %v1286 = vld [vmem:[%s208 + $0x30] sm:$0xff]
      %v1287 = vld [vmem:[%s208 + $0x38] sm:$0xff]
      %v1288 = vld [vmem:[%s208 + $0x40] sm:$0xff]
      %v1289 = vld [vmem:[%s208 + $0x48] sm:$0xff]
      %v1290 = vld [vmem:[%s208 + $0x50] sm:$0xff]
      %v1291 = vld [vmem:[%s208 + $0x58] sm:$0xff]
      %v1292 = vld [vmem:[%s208 + $0x60] sm:$0xff]
      %v1293 = vld [vmem:[%s208 + $0x68] sm:$0xff]
      %v1294 = vld [vmem:[%s208 + $0x70] sm:$0xff]
      %v1295 = vld [vmem:[%s208 + $0x78] sm:$0xff]
      %v1296 = vld [vmem:[%s208 + $0x80] sm:$0xff]
      %v1297 = vld [vmem:[%s208 + $0x88] sm:$0xff]
      %v1298 = vld [vmem:[%s208 + $0x90] sm:$0xff]
      %v1299 = vld [vmem:[%s208 + $0x98] sm:$0xff]
      %v1300 = vld [vmem:[%s208 + $0xa0] sm:$0xff]
      %v1301 = vld [vmem:[%s208 + $0xa8] sm:$0xff]
      %v1302 = vld [vmem:[%s208 + $0xb0] sm:$0xff]
      %v1303 = vld [vmem:[%s208 + $0xb8] sm:$0xff]
      %v1304 = vld [vmem:[%s208 + $0xc0] sm:$0xff]
      %v1305 = vld [vmem:[%s208 + $0xc8] sm:$0xff]
      %v1306 = vld [vmem:[%s208 + $0xd0] sm:$0xff]
      %v1307 = vld [vmem:[%s208 + $0xd8] sm:$0xff]
      %v1308 = vld [vmem:[%s208 + $0xe0] sm:$0xff]
      %v1309 = vld [vmem:[%s208 + $0xe8] sm:$0xff]
      %v1310 = vld [vmem:[%s208 + $0xf0] sm:$0xff]
      %v1311 = vld [vmem:[%s208 + $0xf8] sm:$0xff]
      %v1312 = vld [vmem:[%s208 + $0x100] sm:$0xff]
      %v1313 = vld [vmem:[%s208 + $0x108] sm:$0xff]
      %v1314 = vld [vmem:[%s208 + $0x110] sm:$0xff]
      %v1315 = vld [vmem:[%s208 + $0x118] sm:$0xff]
      %v1316 = vld [vmem:[%s208 + $0x120] sm:$0xff]
      %v1317 = vld [vmem:[%s208 + $0x128] sm:$0xff]
      %v1318 = vld [vmem:[%s208 + $0x130] sm:$0xff]
      %v1319 = vld [vmem:[%s208 + $0x138] sm:$0xff]
      %v1320 = vld [vmem:[%s208 + $0x140] sm:$0xff]
      %v1321 = vld [vmem:[%s208 + $0x148] sm:$0xff]
      %v1322 = vld [vmem:[%s208 + $0x150] sm:$0xff]
      %v1323 = vld [vmem:[%s208 + $0x158] sm:$0xff]
      %v1324 = vld [vmem:[%s208 + $0x160] sm:$0xff]
      %v1325 = vld [vmem:[%s208 + $0x168] sm:$0xff]
      %v1326 = vld [vmem:[%s208 + $0x170] sm:$0xff]
      %v1327 = vld [vmem:[%s208 + $0x178] sm:$0xff]
      %v1328 = vld [vmem:[%s208 + $0x180] sm:$0xff]
      %v1329 = vld [vmem:[%s208 + $0x188] sm:$0xff]
      %v1330 = vld [vmem:[%s208 + $0x190] sm:$0xff]
      %v1331 = vld [vmem:[%s208 + $0x198] sm:$0xff]
      %v1332 = vld [vmem:[%s208 + $0x1a0] sm:$0xff]
      %v1333 = vld [vmem:[%s208 + $0x1a8] sm:$0xff]
      %v1334 = vld [vmem:[%s208 + $0x1b0] sm:$0xff]
      %v1335 = vld [vmem:[%s208 + $0x1b8] sm:$0xff]
      %v1336 = vld [vmem:[%s208 + $0x1c0] sm:$0xff]
      %v1337 = vld [vmem:[%s208 + $0x1c8] sm:$0xff]
      %v1338 = vld [vmem:[%s208 + $0x1d0] sm:$0xff]
      %v1339 = vld [vmem:[%s208 + $0x1d8] sm:$0xff]
      %v1340 = vld [vmem:[%s208 + $0x1e0] sm:$0xff]
      %v1341 = vld [vmem:[%s208 + $0x1e8] sm:$0xff]
      %v1342 = vld [vmem:[%s208 + $0x1f0] sm:$0xff]
      %v1343 = vld [vmem:[%s208 + $0x1f8] sm:$0xff]
      %v1344 = vld [vmem:[%s208 + $0x200] sm:$0xff]
      %v1345 = vld [vmem:[%s208 + $0x208] sm:$0xff]
      %v1346 = vadd.f32 %v1214, 0.001
      %v1347 = vadd.f32 %v1215, 0.001
      %v1348 = vadd.f32 %v1216, 0.001
      %v1349 = vadd.f32 %v1217, 0.001
      %v1350 = vadd.f32 %v1218, 0.001
      %v1351 = vadd.f32 %v1219, 0.001
      %v1352 = vadd.f32 %v1220, 0.001
      %v1353 = vadd.f32 %v1221, 0.001
      %v1354 = vadd.f32 %v1222, 0.001
      %v1355 = vadd.f32 %v1223, 0.001
      %v1356 = vadd.f32 %v1224, 0.001
      %v1357 = vadd.f32 %v1225, 0.001
      %v1358 = vadd.f32 %v1226, 0.001
      %v1359 = vadd.f32 %v1227, 0.001
      %v1360 = vadd.f32 %v1228, 0.001
      %v1361 = vadd.f32 %v1229, 0.001
      %v1362 = vadd.f32 %v1230, 0.001
      %v1363 = vadd.f32 %v1231, 0.001
      %v1364 = vadd.f32 %v1232, 0.001
      %v1365 = vadd.f32 %v1233, 0.001
      %v1366 = vadd.f32 %v1234, 0.001
      %v1367 = vadd.f32 %v1235, 0.001
      %v1368 = vadd.f32 %v1236, 0.001
      %v1369 = vadd.f32 %v1237, 0.001
      %v1370 = vadd.f32 %v1238, 0.001
      %v1371 = vadd.f32 %v1239, 0.001
      %v1372 = vadd.f32 %v1240, 0.001
      %v1373 = vadd.f32 %v1241, 0.001
      %v1374 = vadd.f32 %v1242, 0.001
      %v1375 = vadd.f32 %v1243, 0.001
      %v1376 = vadd.f32 %v1244, 0.001
      %v1377 = vadd.f32 %v1245, 0.001
      %v1378 = vadd.f32 %v1246, 0.001
      %v1379 = vadd.f32 %v1247, 0.001
      %v1380 = vadd.f32 %v1248, 0.001
      %v1381 = vadd.f32 %v1249, 0.001
      %v1382 = vadd.f32 %v1250, 0.001
      %v1383 = vadd.f32 %v1251, 0.001
      %v1384 = vadd.f32 %v1252, 0.001
      %v1385 = vadd.f32 %v1253, 0.001
      %v1386 = vadd.f32 %v1254, 0.001
      %v1387 = vadd.f32 %v1255, 0.001
      %v1388 = vadd.f32 %v1256, 0.001
      %v1389 = vadd.f32 %v1257, 0.001
      %v1390 = vadd.f32 %v1258, 0.001
      %v1391 = vadd.f32 %v1259, 0.001
      %v1392 = vadd.f32 %v1260, 0.001
      %v1393 = vadd.f32 %v1261, 0.001
      %v1394 = vadd.f32 %v1262, 0.001
      %v1395 = vadd.f32 %v1263, 0.001
      %v1396 = vadd.f32 %v1264, 0.001
      %v1397 = vadd.f32 %v1265, 0.001
      %v1398 = vadd.f32 %v1266, 0.001
      %v1399 = vadd.f32 %v1267, 0.001
      %v1400 = vadd.f32 %v1268, 0.001
      %v1401 = vadd.f32 %v1269, 0.001
      %v1402 = vadd.f32 %v1270, 0.001
      %v1403 = vadd.f32 %v1271, 0.001
      %v1404 = vadd.f32 %v1272, 0.001
      %v1405 = vadd.f32 %v1273, 0.001
      %v1406 = vadd.f32 %v1274, 0.001
      %v1407 = vadd.f32 %v1275, 0.001
      %v1408 = vadd.f32 %v1276, 0.001
      %v1409 = vadd.f32 %v1277, 0.001
      %v1410 = vadd.f32 %v1278, 0.001
      %v1411 = vadd.f32 %v1279, 0.001
      %v1412 = vrsqrt.pop %v1346
      %v1413 = vmul.f32 %v1412, %v1346
      %v1414 = vmul.f32 %v1413, %v1412
      %v1415 = vmul.f32 0.5, %v1414
      %v1416 = vsub.f32 1.5, %v1415
      %v1417 = vmul.f32 %v1412, %v1416
      %vm1418 = vweird.f32 %v1346
      %vm1419 = vweird.f32 %v1412
      %vm1420 = vmor %vm1418, %vm1419
      %v1421 = vsel %vm1420, %v1412, %v1417
      %v1422 = vrsqrt.pop %v1347
      %v1423 = vmul.f32 %v1422, %v1347
      %v1424 = vmul.f32 %v1423, %v1422
      %v1425 = vmul.f32 0.5, %v1424
      %v1426 = vsub.f32 1.5, %v1425
      %v1427 = vmul.f32 %v1422, %v1426
      %vm1428 = vweird.f32 %v1347
      %vm1429 = vweird.f32 %v1422
      %vm1430 = vmor %vm1428, %vm1429
      %v1431 = vsel %vm1430, %v1422, %v1427
      %v1432 = vrsqrt.pop %v1348
      %v1433 = vmul.f32 %v1432, %v1348
      %v1434 = vmul.f32 %v1433, %v1432
      %v1435 = vmul.f32 0.5, %v1434
      %v1436 = vsub.f32 1.5, %v1435
      %v1437 = vmul.f32 %v1432, %v1436
      %vm1438 = vweird.f32 %v1348
      %vm1439 = vweird.f32 %v1432
      %vm1440 = vmor %vm1438, %vm1439
      %v1441 = vsel %vm1440, %v1432, %v1437
      %v1442 = vrsqrt.pop %v1349
      %v1443 = vmul.f32 %v1442, %v1349
      %v1444 = vmul.f32 %v1443, %v1442
      %v1445 = vmul.f32 0.5, %v1444
      %v1446 = vsub.f32 1.5, %v1445
      %v1447 = vmul.f32 %v1442, %v1446
      %vm1448 = vweird.f32 %v1349
      %vm1449 = vweird.f32 %v1442
      %vm1450 = vmor %vm1448, %vm1449
      %v1451 = vsel %vm1450, %v1442, %v1447
      %v1452 = vrsqrt.pop %v1350
      %v1453 = vmul.f32 %v1452, %v1350
      %v1454 = vmul.f32 %v1453, %v1452
      %v1455 = vmul.f32 0.5, %v1454
      %v1456 = vsub.f32 1.5, %v1455
      %v1457 = vmul.f32 %v1452, %v1456
      %vm1458 = vweird.f32 %v1350
      %vm1459 = vweird.f32 %v1452
      %vm1460 = vmor %vm1458, %vm1459
      %v1461 = vsel %vm1460, %v1452, %v1457
      %v1462 = vrsqrt.pop %v1351
      %v1463 = vmul.f32 %v1462, %v1351
      %v1464 = vmul.f32 %v1463, %v1462
      %v1465 = vmul.f32 0.5, %v1464
      %v1466 = vsub.f32 1.5, %v1465
      %v1467 = vmul.f32 %v1462, %v1466
      %vm1468 = vweird.f32 %v1351
      %vm1469 = vweird.f32 %v1462
      %vm1470 = vmor %vm1468, %vm1469
      %v1471 = vsel %vm1470, %v1462, %v1467
      %v1472 = vrsqrt.pop %v1352
      %v1473 = vmul.f32 %v1472, %v1352
      %v1474 = vmul.f32 %v1473, %v1472
      %v1475 = vmul.f32 0.5, %v1474
      %v1476 = vsub.f32 1.5, %v1475
      %v1477 = vmul.f32 %v1472, %v1476
      %vm1478 = vweird.f32 %v1352
      %vm1479 = vweird.f32 %v1472
      %vm1480 = vmor %vm1478, %vm1479
      %v1481 = vsel %vm1480, %v1472, %v1477
      %v1482 = vrsqrt.pop %v1353
      %v1483 = vmul.f32 %v1482, %v1353
      %v1484 = vmul.f32 %v1483, %v1482
      %v1485 = vmul.f32 0.5, %v1484
      %v1486 = vsub.f32 1.5, %v1485
      %v1487 = vmul.f32 %v1482, %v1486
      %vm1488 = vweird.f32 %v1353
      %vm1489 = vweird.f32 %v1482
      %vm1490 = vmor %vm1488, %vm1489
      %v1491 = vsel %vm1490, %v1482, %v1487
      %v1492 = vrsqrt.pop %v1354
      %v1493 = vmul.f32 %v1492, %v1354
      %v1494 = vmul.f32 %v1493, %v1492
      %v1495 = vmul.f32 0.5, %v1494
      %v1496 = vsub.f32 1.5, %v1495
      %v1497 = vmul.f32 %v1492, %v1496
      %vm1498 = vweird.f32 %v1354
      %vm1499 = vweird.f32 %v1492
      %vm1500 = vmor %vm1498, %vm1499
      %v1501 = vsel %vm1500, %v1492, %v1497
      %v1502 = vrsqrt.pop %v1355
      %v1503 = vmul.f32 %v1502, %v1355
      %v1504 = vmul.f32 %v1503, %v1502
      %v1505 = vmul.f32 0.5, %v1504
      %v1506 = vsub.f32 1.5, %v1505
      %v1507 = vmul.f32 %v1502, %v1506
      %vm1508 = vweird.f32 %v1355
      %vm1509 = vweird.f32 %v1502
      %vm1510 = vmor %vm1508, %vm1509
      %v1511 = vsel %vm1510, %v1502, %v1507
      %v1512 = vrsqrt.pop %v1356
      %v1513 = vmul.f32 %v1512, %v1356
      %v1514 = vmul.f32 %v1513, %v1512
      %v1515 = vmul.f32 0.5, %v1514
      %v1516 = vsub.f32 1.5, %v1515
      %v1517 = vmul.f32 %v1512, %v1516
      %vm1518 = vweird.f32 %v1356
      %vm1519 = vweird.f32 %v1512
      %vm1520 = vmor %vm1518, %vm1519
      %v1521 = vsel %vm1520, %v1512, %v1517
      %v1522 = vrsqrt.pop %v1357
      %v1523 = vmul.f32 %v1522, %v1357
      %v1524 = vmul.f32 %v1523, %v1522
      %v1525 = vmul.f32 0.5, %v1524
      %v1526 = vsub.f32 1.5, %v1525
      %v1527 = vmul.f32 %v1522, %v1526
      %vm1528 = vweird.f32 %v1357
      %vm1529 = vweird.f32 %v1522
      %vm1530 = vmor %vm1528, %vm1529
      %v1531 = vsel %vm1530, %v1522, %v1527
      %v1532 = vrsqrt.pop %v1358
      %v1533 = vmul.f32 %v1532, %v1358
      %v1534 = vmul.f32 %v1533, %v1532
      %v1535 = vmul.f32 0.5, %v1534
      %v1536 = vsub.f32 1.5, %v1535
      %v1537 = vmul.f32 %v1532, %v1536
      %vm1538 = vweird.f32 %v1358
      %vm1539 = vweird.f32 %v1532
      %vm1540 = vmor %vm1538, %vm1539
      %v1541 = vsel %vm1540, %v1532, %v1537
      %v1542 = vrsqrt.pop %v1359
      %v1543 = vmul.f32 %v1542, %v1359
      %v1544 = vmul.f32 %v1543, %v1542
      %v1545 = vmul.f32 0.5, %v1544
      %v1546 = vsub.f32 1.5, %v1545
      %v1547 = vmul.f32 %v1542, %v1546
      %vm1548 = vweird.f32 %v1359
      %vm1549 = vweird.f32 %v1542
      %vm1550 = vmor %vm1548, %vm1549
      %v1551 = vsel %vm1550, %v1542, %v1547
      %v1552 = vrsqrt.pop %v1360
      %v1553 = vmul.f32 %v1552, %v1360
      %v1554 = vmul.f32 %v1553, %v1552
      %v1555 = vmul.f32 0.5, %v1554
      %v1556 = vsub.f32 1.5, %v1555
      %v1557 = vmul.f32 %v1552, %v1556
      %vm1558 = vweird.f32 %v1360
      %vm1559 = vweird.f32 %v1552
      %vm1560 = vmor %vm1558, %vm1559
      %v1561 = vsel %vm1560, %v1552, %v1557
      %v1562 = vrsqrt.pop %v1361
      %v1563 = vmul.f32 %v1562, %v1361
      %v1564 = vmul.f32 %v1563, %v1562
      %v1565 = vmul.f32 0.5, %v1564
      %v1566 = vsub.f32 1.5, %v1565
      %v1567 = vmul.f32 %v1562, %v1566
      %vm1568 = vweird.f32 %v1361
      %vm1569 = vweird.f32 %v1562
      %vm1570 = vmor %vm1568, %vm1569
      %v1571 = vsel %vm1570, %v1562, %v1567
      %v1572 = vrsqrt.pop %v1362
      %v1573 = vmul.f32 %v1572, %v1362
      %v1574 = vmul.f32 %v1573, %v1572
      %v1575 = vmul.f32 0.5, %v1574
      %v1576 = vsub.f32 1.5, %v1575
      %v1577 = vmul.f32 %v1572, %v1576
      %vm1578 = vweird.f32 %v1362
      %vm1579 = vweird.f32 %v1572
      %vm1580 = vmor %vm1578, %vm1579
      %v1581 = vsel %vm1580, %v1572, %v1577
      %v1582 = vrsqrt.pop %v1363
      %v1583 = vmul.f32 %v1582, %v1363
      %v1584 = vmul.f32 %v1583, %v1582
      %v1585 = vmul.f32 0.5, %v1584
      %v1586 = vsub.f32 1.5, %v1585
      %v1587 = vmul.f32 %v1582, %v1586
      %vm1588 = vweird.f32 %v1363
      %vm1589 = vweird.f32 %v1582
      %vm1590 = vmor %vm1588, %vm1589
      %v1591 = vsel %vm1590, %v1582, %v1587
      %v1592 = vrsqrt.pop %v1364
      %v1593 = vmul.f32 %v1592, %v1364
      %v1594 = vmul.f32 %v1593, %v1592
      %v1595 = vmul.f32 0.5, %v1594
      %v1596 = vsub.f32 1.5, %v1595
      %v1597 = vmul.f32 %v1592, %v1596
      %vm1598 = vweird.f32 %v1364
      %vm1599 = vweird.f32 %v1592
      %vm1600 = vmor %vm1598, %vm1599
      %v1601 = vsel %vm1600, %v1592, %v1597
      %v1602 = vrsqrt.pop %v1365
      %v1603 = vmul.f32 %v1602, %v1365
      %v1604 = vmul.f32 %v1603, %v1602
      %v1605 = vmul.f32 0.5, %v1604
      %v1606 = vsub.f32 1.5, %v1605
      %v1607 = vmul.f32 %v1602, %v1606
      %vm1608 = vweird.f32 %v1365
      %vm1609 = vweird.f32 %v1602
      %vm1610 = vmor %vm1608, %vm1609
      %v1611 = vsel %vm1610, %v1602, %v1607
      %v1612 = vrsqrt.pop %v1366
      %v1613 = vmul.f32 %v1612, %v1366
      %v1614 = vmul.f32 %v1613, %v1612
      %v1615 = vmul.f32 0.5, %v1614
      %v1616 = vsub.f32 1.5, %v1615
      %v1617 = vmul.f32 %v1612, %v1616
      %vm1618 = vweird.f32 %v1366
      %vm1619 = vweird.f32 %v1612
      %vm1620 = vmor %vm1618, %vm1619
      %v1621 = vsel %vm1620, %v1612, %v1617
      %v1622 = vrsqrt.pop %v1367
      %v1623 = vmul.f32 %v1622, %v1367
      %v1624 = vmul.f32 %v1623, %v1622
      %v1625 = vmul.f32 0.5, %v1624
      %v1626 = vsub.f32 1.5, %v1625
      %v1627 = vmul.f32 %v1622, %v1626
      %vm1628 = vweird.f32 %v1367
      %vm1629 = vweird.f32 %v1622
      %vm1630 = vmor %vm1628, %vm1629
      %v1631 = vsel %vm1630, %v1622, %v1627
      %v1632 = vrsqrt.pop %v1368
      %v1633 = vmul.f32 %v1632, %v1368
      %v1634 = vmul.f32 %v1633, %v1632
      %v1635 = vmul.f32 0.5, %v1634
      %v1636 = vsub.f32 1.5, %v1635
      %v1637 = vmul.f32 %v1632, %v1636
      %vm1638 = vweird.f32 %v1368
      %vm1639 = vweird.f32 %v1632
      %vm1640 = vmor %vm1638, %vm1639
      %v1641 = vsel %vm1640, %v1632, %v1637
      %v1642 = vrsqrt.pop %v1369
      %v1643 = vmul.f32 %v1642, %v1369
      %v1644 = vmul.f32 %v1643, %v1642
      %v1645 = vmul.f32 0.5, %v1644
      %v1646 = vsub.f32 1.5, %v1645
      %v1647 = vmul.f32 %v1642, %v1646
      %vm1648 = vweird.f32 %v1369
      %vm1649 = vweird.f32 %v1642
      %vm1650 = vmor %vm1648, %vm1649
      %v1651 = vsel %vm1650, %v1642, %v1647
      %v1652 = vrsqrt.pop %v1370
      %v1653 = vmul.f32 %v1652, %v1370
      %v1654 = vmul.f32 %v1653, %v1652
      %v1655 = vmul.f32 0.5, %v1654
      %v1656 = vsub.f32 1.5, %v1655
      %v1657 = vmul.f32 %v1652, %v1656
      %vm1658 = vweird.f32 %v1370
      %vm1659 = vweird.f32 %v1652
      %vm1660 = vmor %vm1658, %vm1659
      %v1661 = vsel %vm1660, %v1652, %v1657
      %v1662 = vrsqrt.pop %v1371
      %v1663 = vmul.f32 %v1662, %v1371
      %v1664 = vmul.f32 %v1663, %v1662
      %v1665 = vmul.f32 0.5, %v1664
      %v1666 = vsub.f32 1.5, %v1665
      %v1667 = vmul.f32 %v1662, %v1666
      %vm1668 = vweird.f32 %v1371
      %vm1669 = vweird.f32 %v1662
      %vm1670 = vmor %vm1668, %vm1669
      %v1671 = vsel %vm1670, %v1662, %v1667
      %v1672 = vrsqrt.pop %v1372
      %v1673 = vmul.f32 %v1672, %v1372
      %v1674 = vmul.f32 %v1673, %v1672
      %v1675 = vmul.f32 0.5, %v1674
      %v1676 = vsub.f32 1.5, %v1675
      %v1677 = vmul.f32 %v1672, %v1676
      %vm1678 = vweird.f32 %v1372
      %vm1679 = vweird.f32 %v1672
      %vm1680 = vmor %vm1678, %vm1679
      %v1681 = vsel %vm1680, %v1672, %v1677
      %v1682 = vrsqrt.pop %v1373
      %v1683 = vmul.f32 %v1682, %v1373
      %v1684 = vmul.f32 %v1683, %v1682
      %v1685 = vmul.f32 0.5, %v1684
      %v1686 = vsub.f32 1.5, %v1685
      %v1687 = vmul.f32 %v1682, %v1686
      %vm1688 = vweird.f32 %v1373
      %vm1689 = vweird.f32 %v1682
      %vm1690 = vmor %vm1688, %vm1689
      %v1691 = vsel %vm1690, %v1682, %v1687
      %v1692 = vrsqrt.pop %v1374
      %v1693 = vmul.f32 %v1692, %v1374
      %v1694 = vmul.f32 %v1693, %v1692
      %v1695 = vmul.f32 0.5, %v1694
      %v1696 = vsub.f32 1.5, %v1695
      %v1697 = vmul.f32 %v1692, %v1696
      %vm1698 = vweird.f32 %v1374
      %vm1699 = vweird.f32 %v1692
      %vm1700 = vmor %vm1698, %vm1699
      %v1701 = vsel %vm1700, %v1692, %v1697
      %v1702 = vrsqrt.pop %v1375
      %v1703 = vmul.f32 %v1702, %v1375
      %v1704 = vmul.f32 %v1703, %v1702
      %v1705 = vmul.f32 0.5, %v1704
      %v1706 = vsub.f32 1.5, %v1705
      %v1707 = vmul.f32 %v1702, %v1706
      %vm1708 = vweird.f32 %v1375
      %vm1709 = vweird.f32 %v1702
      %vm1710 = vmor %vm1708, %vm1709
      %v1711 = vsel %vm1710, %v1702, %v1707
      %v1712 = vrsqrt.pop %v1376
      %v1713 = vmul.f32 %v1712, %v1376
      %v1714 = vmul.f32 %v1713, %v1712
      %v1715 = vmul.f32 0.5, %v1714
      %v1716 = vsub.f32 1.5, %v1715
      %v1717 = vmul.f32 %v1712, %v1716
      %vm1718 = vweird.f32 %v1376
      %vm1719 = vweird.f32 %v1712
      %vm1720 = vmor %vm1718, %vm1719
      %v1721 = vsel %vm1720, %v1712, %v1717
      %v1722 = vrsqrt.pop %v1377
      %v1723 = vmul.f32 %v1722, %v1377
      %v1724 = vmul.f32 %v1723, %v1722
      %v1725 = vmul.f32 0.5, %v1724
      %v1726 = vsub.f32 1.5, %v1725
      %v1727 = vmul.f32 %v1722, %v1726
      %vm1728 = vweird.f32 %v1377
      %vm1729 = vweird.f32 %v1722
      %vm1730 = vmor %vm1728, %vm1729
      %v1731 = vsel %vm1730, %v1722, %v1727
      %v1732 = vrsqrt.pop %v1378
      %v1733 = vmul.f32 %v1732, %v1378
      %v1734 = vmul.f32 %v1733, %v1732
      %v1735 = vmul.f32 0.5, %v1734
      %v1736 = vsub.f32 1.5, %v1735
      %v1737 = vmul.f32 %v1732, %v1736
      %vm1738 = vweird.f32 %v1378
      %vm1739 = vweird.f32 %v1732
      %vm1740 = vmor %vm1738, %vm1739
      %v1741 = vsel %vm1740, %v1732, %v1737
      %v1742 = vrsqrt.pop %v1379
      %v1743 = vmul.f32 %v1742, %v1379
      %v1744 = vmul.f32 %v1743, %v1742
      %v1745 = vmul.f32 0.5, %v1744
      %v1746 = vsub.f32 1.5, %v1745
      %v1747 = vmul.f32 %v1742, %v1746
      %vm1748 = vweird.f32 %v1379
      %vm1749 = vweird.f32 %v1742
      %vm1750 = vmor %vm1748, %vm1749
      %v1751 = vsel %vm1750, %v1742, %v1747
      %v1752 = vrsqrt.pop %v1380
      %v1753 = vmul.f32 %v1752, %v1380
      %v1754 = vmul.f32 %v1753, %v1752
      %v1755 = vmul.f32 0.5, %v1754
      %v1756 = vsub.f32 1.5, %v1755
      %v1757 = vmul.f32 %v1752, %v1756
      %vm1758 = vweird.f32 %v1380
      %vm1759 = vweird.f32 %v1752
      %vm1760 = vmor %vm1758, %vm1759
      %v1761 = vsel %vm1760, %v1752, %v1757
      %v1762 = vrsqrt.pop %v1381
      %v1763 = vmul.f32 %v1762, %v1381
      %v1764 = vmul.f32 %v1763, %v1762
      %v1765 = vmul.f32 0.5, %v1764
      %v1766 = vsub.f32 1.5, %v1765
      %v1767 = vmul.f32 %v1762, %v1766
      %vm1768 = vweird.f32 %v1381
      %vm1769 = vweird.f32 %v1762
      %vm1770 = vmor %vm1768, %vm1769
      %v1771 = vsel %vm1770, %v1762, %v1767
      %v1772 = vrsqrt.pop %v1382
      %v1773 = vmul.f32 %v1772, %v1382
      %v1774 = vmul.f32 %v1773, %v1772
      %v1775 = vmul.f32 0.5, %v1774
      %v1776 = vsub.f32 1.5, %v1775
      %v1777 = vmul.f32 %v1772, %v1776
      %vm1778 = vweird.f32 %v1382
      %vm1779 = vweird.f32 %v1772
      %vm1780 = vmor %vm1778, %vm1779
      %v1781 = vsel %vm1780, %v1772, %v1777
      %v1782 = vrsqrt.pop %v1383
      %v1783 = vmul.f32 %v1782, %v1383
      %v1784 = vmul.f32 %v1783, %v1782
      %v1785 = vmul.f32 0.5, %v1784
      %v1786 = vsub.f32 1.5, %v1785
      %v1787 = vmul.f32 %v1782, %v1786
      %vm1788 = vweird.f32 %v1383
      %vm1789 = vweird.f32 %v1782
      %vm1790 = vmor %vm1788, %vm1789
      %v1791 = vsel %vm1790, %v1782, %v1787
      %v1792 = vrsqrt.pop %v1384
      %v1793 = vmul.f32 %v1792, %v1384
      %v1794 = vmul.f32 %v1793, %v1792
      %v1795 = vmul.f32 0.5, %v1794
      %v1796 = vsub.f32 1.5, %v1795
      %v1797 = vmul.f32 %v1792, %v1796
      %vm1798 = vweird.f32 %v1384
      %vm1799 = vweird.f32 %v1792
      %vm1800 = vmor %vm1798, %vm1799
      %v1801 = vsel %vm1800, %v1792, %v1797
      %v1802 = vrsqrt.pop %v1385
      %v1803 = vmul.f32 %v1802, %v1385
      %v1804 = vmul.f32 %v1803, %v1802
      %v1805 = vmul.f32 0.5, %v1804
      %v1806 = vsub.f32 1.5, %v1805
      %v1807 = vmul.f32 %v1802, %v1806
      %vm1808 = vweird.f32 %v1385
      %vm1809 = vweird.f32 %v1802
      %vm1810 = vmor %vm1808, %vm1809
      %v1811 = vsel %vm1810, %v1802, %v1807
      %v1812 = vrsqrt.pop %v1386
      %v1813 = vmul.f32 %v1812, %v1386
      %v1814 = vmul.f32 %v1813, %v1812
      %v1815 = vmul.f32 0.5, %v1814
      %v1816 = vsub.f32 1.5, %v1815
      %v1817 = vmul.f32 %v1812, %v1816
      %vm1818 = vweird.f32 %v1386
      %vm1819 = vweird.f32 %v1812
      %vm1820 = vmor %vm1818, %vm1819
      %v1821 = vsel %vm1820, %v1812, %v1817
      %v1822 = vrsqrt.pop %v1387
      %v1823 = vmul.f32 %v1822, %v1387
      %v1824 = vmul.f32 %v1823, %v1822
      %v1825 = vmul.f32 0.5, %v1824
      %v1826 = vsub.f32 1.5, %v1825
      %v1827 = vmul.f32 %v1822, %v1826
      %vm1828 = vweird.f32 %v1387
      %vm1829 = vweird.f32 %v1822
      %vm1830 = vmor %vm1828, %vm1829
      %v1831 = vsel %vm1830, %v1822, %v1827
      %v1832 = vrsqrt.pop %v1388
      %v1833 = vmul.f32 %v1832, %v1388
      %v1834 = vmul.f32 %v1833, %v1832
      %v1835 = vmul.f32 0.5, %v1834
      %v1836 = vsub.f32 1.5, %v1835
      %v1837 = vmul.f32 %v1832, %v1836
      %vm1838 = vweird.f32 %v1388
      %vm1839 = vweird.f32 %v1832
      %vm1840 = vmor %vm1838, %vm1839
      %v1841 = vsel %vm1840, %v1832, %v1837
      %v1842 = vrsqrt.pop %v1389
      %v1843 = vmul.f32 %v1842, %v1389
      %v1844 = vmul.f32 %v1843, %v1842
      %v1845 = vmul.f32 0.5, %v1844
      %v1846 = vsub.f32 1.5, %v1845
      %v1847 = vmul.f32 %v1842, %v1846
      %vm1848 = vweird.f32 %v1389
      %vm1849 = vweird.f32 %v1842
      %vm1850 = vmor %vm1848, %vm1849
      %v1851 = vsel %vm1850, %v1842, %v1847
      %v1852 = vrsqrt.pop %v1390
      %v1853 = vmul.f32 %v1852, %v1390
      %v1854 = vmul.f32 %v1853, %v1852
      %v1855 = vmul.f32 0.5, %v1854
      %v1856 = vsub.f32 1.5, %v1855
      %v1857 = vmul.f32 %v1852, %v1856
      %vm1858 = vweird.f32 %v1390
      %vm1859 = vweird.f32 %v1852
      %vm1860 = vmor %vm1858, %vm1859
      %v1861 = vsel %vm1860, %v1852, %v1857
      %v1862 = vrsqrt.pop %v1391
      %v1863 = vmul.f32 %v1862, %v1391
      %v1864 = vmul.f32 %v1863, %v1862
      %v1865 = vmul.f32 0.5, %v1864
      %v1866 = vsub.f32 1.5, %v1865
      %v1867 = vmul.f32 %v1862, %v1866
      %vm1868 = vweird.f32 %v1391
      %vm1869 = vweird.f32 %v1862
      %vm1870 = vmor %vm1868, %vm1869
      %v1871 = vsel %vm1870, %v1862, %v1867
      %v1872 = vrsqrt.pop %v1392
      %v1873 = vmul.f32 %v1872, %v1392
      %v1874 = vmul.f32 %v1873, %v1872
      %v1875 = vmul.f32 0.5, %v1874
      %v1876 = vsub.f32 1.5, %v1875
      %v1877 = vmul.f32 %v1872, %v1876
      %vm1878 = vweird.f32 %v1392
      %vm1879 = vweird.f32 %v1872
      %vm1880 = vmor %vm1878, %vm1879
      %v1881 = vsel %vm1880, %v1872, %v1877
      %v1882 = vrsqrt.pop %v1393
      %v1883 = vmul.f32 %v1882, %v1393
      %v1884 = vmul.f32 %v1883, %v1882
      %v1885 = vmul.f32 0.5, %v1884
      %v1886 = vsub.f32 1.5, %v1885
      %v1887 = vmul.f32 %v1882, %v1886
      %vm1888 = vweird.f32 %v1393
      %vm1889 = vweird.f32 %v1882
      %vm1890 = vmor %vm1888, %vm1889
      %v1891 = vsel %vm1890, %v1882, %v1887
      %v1892 = vrsqrt.pop %v1394
      %v1893 = vmul.f32 %v1892, %v1394
      %v1894 = vmul.f32 %v1893, %v1892
      %v1895 = vmul.f32 0.5, %v1894
      %v1896 = vsub.f32 1.5, %v1895
      %v1897 = vmul.f32 %v1892, %v1896
      %vm1898 = vweird.f32 %v1394
      %vm1899 = vweird.f32 %v1892
      %vm1900 = vmor %vm1898, %vm1899
      %v1901 = vsel %vm1900, %v1892, %v1897
      %v1902 = vrsqrt.pop %v1395
      %v1903 = vmul.f32 %v1902, %v1395
      %v1904 = vmul.f32 %v1903, %v1902
      %v1905 = vmul.f32 0.5, %v1904
      %v1906 = vsub.f32 1.5, %v1905
      %v1907 = vmul.f32 %v1902, %v1906
      %vm1908 = vweird.f32 %v1395
      %vm1909 = vweird.f32 %v1902
      %vm1910 = vmor %vm1908, %vm1909
      %v1911 = vsel %vm1910, %v1902, %v1907
      %v1912 = vrsqrt.pop %v1396
      %v1913 = vmul.f32 %v1912, %v1396
      %v1914 = vmul.f32 %v1913, %v1912
      %v1915 = vmul.f32 0.5, %v1914
      %v1916 = vsub.f32 1.5, %v1915
      %v1917 = vmul.f32 %v1912, %v1916
      %vm1918 = vweird.f32 %v1396
      %vm1919 = vweird.f32 %v1912
      %vm1920 = vmor %vm1918, %vm1919
      %v1921 = vsel %vm1920, %v1912, %v1917
      %v1922 = vrsqrt.pop %v1397
      %v1923 = vmul.f32 %v1922, %v1397
      %v1924 = vmul.f32 %v1923, %v1922
      %v1925 = vmul.f32 0.5, %v1924
      %v1926 = vsub.f32 1.5, %v1925
      %v1927 = vmul.f32 %v1922, %v1926
      %vm1928 = vweird.f32 %v1397
      %vm1929 = vweird.f32 %v1922
      %vm1930 = vmor %vm1928, %vm1929
      %v1931 = vsel %vm1930, %v1922, %v1927
      %v1932 = vrsqrt.pop %v1398
      %v1933 = vmul.f32 %v1932, %v1398
      %v1934 = vmul.f32 %v1933, %v1932
      %v1935 = vmul.f32 0.5, %v1934
      %v1936 = vsub.f32 1.5, %v1935
      %v1937 = vmul.f32 %v1932, %v1936
      %vm1938 = vweird.f32 %v1398
      %vm1939 = vweird.f32 %v1932
      %vm1940 = vmor %vm1938, %vm1939
      %v1941 = vsel %vm1940, %v1932, %v1937
      %v1942 = vrsqrt.pop %v1399
      %v1943 = vmul.f32 %v1942, %v1399
      %v1944 = vmul.f32 %v1943, %v1942
      %v1945 = vmul.f32 0.5, %v1944
      %v1946 = vsub.f32 1.5, %v1945
      %v1947 = vmul.f32 %v1942, %v1946
      %vm1948 = vweird.f32 %v1399
      %vm1949 = vweird.f32 %v1942
      %vm1950 = vmor %vm1948, %vm1949
      %v1951 = vsel %vm1950, %v1942, %v1947
      %v1952 = vrsqrt.pop %v1400
      %v1953 = vmul.f32 %v1952, %v1400
      %v1954 = vmul.f32 %v1953, %v1952
      %v1955 = vmul.f32 0.5, %v1954
      %v1956 = vsub.f32 1.5, %v1955
      %v1957 = vmul.f32 %v1952, %v1956
      %vm1958 = vweird.f32 %v1400
      %vm1959 = vweird.f32 %v1952
      %vm1960 = vmor %vm1958, %vm1959
      %v1961 = vsel %vm1960, %v1952, %v1957
      %v1962 = vrsqrt.pop %v1401
      %v1963 = vmul.f32 %v1962, %v1401
      %v1964 = vmul.f32 %v1963, %v1962
      %v1965 = vmul.f32 0.5, %v1964
      %v1966 = vsub.f32 1.5, %v1965
      %v1967 = vmul.f32 %v1962, %v1966
      %vm1968 = vweird.f32 %v1401
      %vm1969 = vweird.f32 %v1962
      %vm1970 = vmor %vm1968, %vm1969
      %v1971 = vsel %vm1970, %v1962, %v1967
      %v1972 = vrsqrt.pop %v1402
      %v1973 = vmul.f32 %v1972, %v1402
      %v1974 = vmul.f32 %v1973, %v1972
      %v1975 = vmul.f32 0.5, %v1974
      %v1976 = vsub.f32 1.5, %v1975
      %v1977 = vmul.f32 %v1972, %v1976
      %vm1978 = vweird.f32 %v1402
      %vm1979 = vweird.f32 %v1972
      %vm1980 = vmor %vm1978, %vm1979
      %v1981 = vsel %vm1980, %v1972, %v1977
      %v1982 = vrsqrt.pop %v1403
      %v1983 = vmul.f32 %v1982, %v1403
      %v1984 = vmul.f32 %v1983, %v1982
      %v1985 = vmul.f32 0.5, %v1984
      %v1986 = vsub.f32 1.5, %v1985
      %v1987 = vmul.f32 %v1982, %v1986
      %vm1988 = vweird.f32 %v1403
      %vm1989 = vweird.f32 %v1982
      %vm1990 = vmor %vm1988, %vm1989
      %v1991 = vsel %vm1990, %v1982, %v1987
      %v1992 = vrsqrt.pop %v1404
      %v1993 = vmul.f32 %v1992, %v1404
      %v1994 = vmul.f32 %v1993, %v1992
      %v1995 = vmul.f32 0.5, %v1994
      %v1996 = vsub.f32 1.5, %v1995
      %v1997 = vmul.f32 %v1992, %v1996
      %vm1998 = vweird.f32 %v1404
      %vm1999 = vweird.f32 %v1992
      %vm2000 = vmor %vm1998, %vm1999
      %v2001 = vsel %vm2000, %v1992, %v1997
      %v2002 = vrsqrt.pop %v1405
      %v2003 = vmul.f32 %v2002, %v1405
      %v2004 = vmul.f32 %v2003, %v2002
      %v2005 = vmul.f32 0.5, %v2004
      %v2006 = vsub.f32 1.5, %v2005
      %v2007 = vmul.f32 %v2002, %v2006
      %vm2008 = vweird.f32 %v1405
      %vm2009 = vweird.f32 %v2002
      %vm2010 = vmor %vm2008, %vm2009
      %v2011 = vsel %vm2010, %v2002, %v2007
      %v2012 = vrsqrt.pop %v1406
      %v2013 = vmul.f32 %v2012, %v1406
      %v2014 = vmul.f32 %v2013, %v2012
      %v2015 = vmul.f32 0.5, %v2014
      %v2016 = vsub.f32 1.5, %v2015
      %v2017 = vmul.f32 %v2012, %v2016
      %vm2018 = vweird.f32 %v1406
      %vm2019 = vweird.f32 %v2012
      %vm2020 = vmor %vm2018, %vm2019
      %v2021 = vsel %vm2020, %v2012, %v2017
      %v2022 = vrsqrt.pop %v1407
      %v2023 = vmul.f32 %v2022, %v1407
      %v2024 = vmul.f32 %v2023, %v2022
      %v2025 = vmul.f32 0.5, %v2024
      %v2026 = vsub.f32 1.5, %v2025
      %v2027 = vmul.f32 %v2022, %v2026
      %vm2028 = vweird.f32 %v1407
      %vm2029 = vweird.f32 %v2022
      %vm2030 = vmor %vm2028, %vm2029
      %v2031 = vsel %vm2030, %v2022, %v2027
      %v2032 = vrsqrt.pop %v1408
      %v2033 = vmul.f32 %v2032, %v1408
      %v2034 = vmul.f32 %v2033, %v2032
      %v2035 = vmul.f32 0.5, %v2034
      %v2036 = vsub.f32 1.5, %v2035
      %v2037 = vmul.f32 %v2032, %v2036
      %vm2038 = vweird.f32 %v1408
      %vm2039 = vweird.f32 %v2032
      %vm2040 = vmor %vm2038, %vm2039
      %v2041 = vsel %vm2040, %v2032, %v2037
      %v2042 = vrsqrt.pop %v1409
      %v2043 = vmul.f32 %v2042, %v1409
      %v2044 = vmul.f32 %v2043, %v2042
      %v2045 = vmul.f32 0.5, %v2044
      %v2046 = vsub.f32 1.5, %v2045
      %v2047 = vmul.f32 %v2042, %v2046
      %vm2048 = vweird.f32 %v1409
      %vm2049 = vweird.f32 %v2042
      %vm2050 = vmor %vm2048, %vm2049
      %v2051 = vsel %vm2050, %v2042, %v2047
      %v2052 = vrsqrt.pop %v1410
      %v2053 = vmul.f32 %v2052, %v1410
      %v2054 = vmul.f32 %v2053, %v2052
      %v2055 = vmul.f32 0.5, %v2054
      %v2056 = vsub.f32 1.5, %v2055
      %v2057 = vmul.f32 %v2052, %v2056
      %vm2058 = vweird.f32 %v1410
      %vm2059 = vweird.f32 %v2052
      %vm2060 = vmor %vm2058, %vm2059
      %v2061 = vsel %vm2060, %v2052, %v2057
      %v2062 = vrsqrt.pop %v1411
      %v2063 = vmul.f32 %v2062, %v1411
      %v2064 = vmul.f32 %v2063, %v2062
      %v2065 = vmul.f32 0.5, %v2064
      %v2066 = vsub.f32 1.5, %v2065
      %v2067 = vmul.f32 %v2062, %v2066
      %vm2068 = vweird.f32 %v1411
      %vm2069 = vweird.f32 %v2062
      %vm2070 = vmor %vm2068, %vm2069
      %v2071 = vsel %vm2070, %v2062, %v2067
      %v2072 = vmul.f32 %v1280, %v1421
      %v2073 = vmul.f32 %v1281, %v1431
      %v2074 = vmul.f32 %v1282, %v1441
      %v2075 = vmul.f32 %v1283, %v1451
      %v2076 = vmul.f32 %v1284, %v1461
      %v2077 = vmul.f32 %v1285, %v1471
      %v2078 = vmul.f32 %v1286, %v1481
      %v2079 = vmul.f32 %v1287, %v1491
      %v2080 = vmul.f32 %v1288, %v1501
      %v2081 = vmul.f32 %v1289, %v1511
      %v2082 = vmul.f32 %v1290, %v1521
      %v2083 = vmul.f32 %v1291, %v1531
      %v2084 = vmul.f32 %v1292, %v1541
      %v2085 = vmul.f32 %v1293, %v1551
      %v2086 = vmul.f32 %v1294, %v1561
      %v2087 = vmul.f32 %v1295, %v1571
      %v2088 = vmul.f32 %v1296, %v1581
      %v2089 = vmul.f32 %v1297, %v1591
      %v2090 = vmul.f32 %v1298, %v1601
      %v2091 = vmul.f32 %v1299, %v1611
      %v2092 = vmul.f32 %v1300, %v1621
      %v2093 = vmul.f32 %v1301, %v1631
      %v2094 = vmul.f32 %v1302, %v1641
      %v2095 = vmul.f32 %v1303, %v1651
      %v2096 = vmul.f32 %v1304, %v1661
      %v2097 = vmul.f32 %v1305, %v1671
      %v2098 = vmul.f32 %v1306, %v1681
      %v2099 = vmul.f32 %v1307, %v1691
      %v2100 = vmul.f32 %v1308, %v1701
      %v2101 = vmul.f32 %v1309, %v1711
      %v2102 = vmul.f32 %v1310, %v1721
      %v2103 = vmul.f32 %v1311, %v1731
      %v2104 = vmul.f32 %v1312, %v1741
      %v2105 = vmul.f32 %v1313, %v1751
      %v2106 = vmul.f32 %v1314, %v1761
      %v2107 = vmul.f32 %v1315, %v1771
      %v2108 = vmul.f32 %v1316, %v1781
      %v2109 = vmul.f32 %v1317, %v1791
      %v2110 = vmul.f32 %v1318, %v1801
      %v2111 = vmul.f32 %v1319, %v1811
      %v2112 = vmul.f32 %v1320, %v1821
      %v2113 = vmul.f32 %v1321, %v1831
      %v2114 = vmul.f32 %v1322, %v1841
      %v2115 = vmul.f32 %v1323, %v1851
      %v2116 = vmul.f32 %v1324, %v1861
      %v2117 = vmul.f32 %v1325, %v1871
      %v2118 = vmul.f32 %v1326, %v1881
      %v2119 = vmul.f32 %v1327, %v1891
      %v2120 = vmul.f32 %v1328, %v1901
      %v2121 = vmul.f32 %v1329, %v1911
      %v2122 = vmul.f32 %v1330, %v1921
      %v2123 = vmul.f32 %v1331, %v1931
      %v2124 = vmul.f32 %v1332, %v1941
      %v2125 = vmul.f32 %v1333, %v1951
      %v2126 = vmul.f32 %v1334, %v1961
      %v2127 = vmul.f32 %v1335, %v1971
      %v2128 = vmul.f32 %v1336, %v1981
      %v2129 = vmul.f32 %v1337, %v1991
      %v2130 = vmul.f32 %v1338, %v2001
      %v2131 = vmul.f32 %v1339, %v2011
      %v2132 = vmul.f32 %v1340, %v2021
      %v2133 = vmul.f32 %v1341, %v2031
      %v2134 = vmul.f32 %v1342, %v2041
      %v2135 = vmul.f32 %v1343, %v2051
      %v2136 = vmul.f32 %v1344, %v2061
      %v2137 = vmul.f32 %v1345, %v2071
      %v2138 = vld [vmem:[%s214] sm:$0xff]
      %v2139 = vld [vmem:[%s214 + $0x8] sm:$0xff]
      %v2140 = vld [vmem:[%s214 + $0x10] sm:$0xff]
      %v2141 = vld [vmem:[%s214 + $0x18] sm:$0xff]
      %v2142 = vld [vmem:[%s214 + $0x20] sm:$0xff]
      %v2143 = vld [vmem:[%s214 + $0x28] sm:$0xff]
      %v2144 = vld [vmem:[%s214 + $0x30] sm:$0xff]
      %v2145 = vld [vmem:[%s214 + $0x38] sm:$0xff]
      %v2146 = vld [vmem:[%s214 + $0x40] sm:$0xff]
      %v2147 = vld [vmem:[%s214 + $0x48] sm:$0xff]
      %v2148 = vld [vmem:[%s214 + $0x50] sm:$0xff]
      %v2149 = vld [vmem:[%s214 + $0x58] sm:$0xff]
      %v2150 = vld [vmem:[%s214 + $0x60] sm:$0xff]
      %v2151 = vld [vmem:[%s214 + $0x68] sm:$0xff]
      %v2152 = vld [vmem:[%s214 + $0x70] sm:$0xff]
      %v2153 = vld [vmem:[%s214 + $0x78] sm:$0xff]
      %v2154 = vld [vmem:[%s214 + $0x80] sm:$0xff]
      %v2155 = vld [vmem:[%s214 + $0x88] sm:$0xff]
      %v2156 = vld [vmem:[%s214 + $0x90] sm:$0xff]
      %v2157 = vld [vmem:[%s214 + $0x98] sm:$0xff]
      %v2158 = vld [vmem:[%s214 + $0xa0] sm:$0xff]
      %v2159 = vld [vmem:[%s214 + $0xa8] sm:$0xff]
      %v2160 = vld [vmem:[%s214 + $0xb0] sm:$0xff]
      %v2161 = vld [vmem:[%s214 + $0xb8] sm:$0xff]
      %v2162 = vld [vmem:[%s214 + $0xc0] sm:$0xff]
      %v2163 = vld [vmem:[%s214 + $0xc8] sm:$0xff]
      %v2164 = vld [vmem:[%s214 + $0xd0] sm:$0xff]
      %v2165 = vld [vmem:[%s214 + $0xd8] sm:$0xff]
      %v2166 = vld [vmem:[%s214 + $0xe0] sm:$0xff]
      %v2167 = vld [vmem:[%s214 + $0xe8] sm:$0xff]
      %v2168 = vld [vmem:[%s214 + $0xf0] sm:$0xff]
      %v2169 = vld [vmem:[%s214 + $0xf8] sm:$0xff]
      %v2170 = vld [vmem:[%s214 + $0x100] sm:$0xff]
      %v2171 = vld [vmem:[%s214 + $0x108] sm:$0xff]
      %v2172 = vld [vmem:[%s214 + $0x110] sm:$0xff]
      %v2173 = vld [vmem:[%s214 + $0x118] sm:$0xff]
      %v2174 = vld [vmem:[%s214 + $0x120] sm:$0xff]
      %v2175 = vld [vmem:[%s214 + $0x128] sm:$0xff]
      %v2176 = vld [vmem:[%s214 + $0x130] sm:$0xff]
      %v2177 = vld [vmem:[%s214 + $0x138] sm:$0xff]
      %v2178 = vld [vmem:[%s214 + $0x140] sm:$0xff]
      %v2179 = vld [vmem:[%s214 + $0x148] sm:$0xff]
      %v2180 = vld [vmem:[%s214 + $0x150] sm:$0xff]
      %v2181 = vld [vmem:[%s214 + $0x158] sm:$0xff]
      %v2182 = vld [vmem:[%s214 + $0x160] sm:$0xff]
      %v2183 = vld [vmem:[%s214 + $0x168] sm:$0xff]
      %v2184 = vld [vmem:[%s214 + $0x170] sm:$0xff]
      %v2185 = vld [vmem:[%s214 + $0x178] sm:$0xff]
      %v2186 = vld [vmem:[%s214 + $0x180] sm:$0xff]
      %v2187 = vld [vmem:[%s214 + $0x188] sm:$0xff]
      %v2188 = vld [vmem:[%s214 + $0x190] sm:$0xff]
      %v2189 = vld [vmem:[%s214 + $0x198] sm:$0xff]
      %v2190 = vld [vmem:[%s214 + $0x1a0] sm:$0xff]
      %v2191 = vld [vmem:[%s214 + $0x1a8] sm:$0xff]
      %v2192 = vld [vmem:[%s214 + $0x1b0] sm:$0xff]
      %v2193 = vld [vmem:[%s214 + $0x1b8] sm:$0xff]
      %v2194 = vld [vmem:[%s214 + $0x1c0] sm:$0xff]
      %v2195 = vld [vmem:[%s214 + $0x1c8] sm:$0xff]
      %v2196 = vld [vmem:[%s214 + $0x1d0] sm:$0xff]
      %v2197 = vld [vmem:[%s214 + $0x1d8] sm:$0xff]
      %v2198 = vld [vmem:[%s214 + $0x1e0] sm:$0xff]
      %v2199 = vld [vmem:[%s214 + $0x1e8] sm:$0xff]
      %v2200 = vld [vmem:[%s214 + $0x1f0] sm:$0xff]
      %v2201 = vld [vmem:[%s214 + $0x1f8] sm:$0xff]
      %v2202 = vld [vmem:[%s214 + $0x200] sm:$0xff]
      %v2203 = vld [vmem:[%s214 + $0x208] sm:$0xff]
      %v2204 = vmul.f32 %v1016, %v2072
      %v2205 = vmul.f32 %v1017, %v2073
      %v2206 = vmul.f32 %v1018, %v2074
      %v2207 = vmul.f32 %v1019, %v2075
      %v2208 = vmul.f32 %v1020, %v2076
      %v2209 = vmul.f32 %v1021, %v2077
      %v2210 = vmul.f32 %v1022, %v2078
      %v2211 = vmul.f32 %v1023, %v2079
      %v2212 = vmul.f32 %v1024, %v2080
      %v2213 = vmul.f32 %v1025, %v2081
      %v2214 = vmul.f32 %v1026, %v2082
      %v2215 = vmul.f32 %v1027, %v2083
      %v2216 = vmul.f32 %v1028, %v2084
      %v2217 = vmul.f32 %v1029, %v2085
      %v2218 = vmul.f32 %v1030, %v2086
      %v2219 = vmul.f32 %v1031, %v2087
      %v2220 = vmul.f32 %v1032, %v2088
      %v2221 = vmul.f32 %v1033, %v2089
      %v2222 = vmul.f32 %v1034, %v2090
      %v2223 = vmul.f32 %v1035, %v2091
      %v2224 = vmul.f32 %v1036, %v2092
      %v2225 = vmul.f32 %v1037, %v2093
      %v2226 = vmul.f32 %v1038, %v2094
      %v2227 = vmul.f32 %v1039, %v2095
      %v2228 = vmul.f32 %v1040, %v2096
      %v2229 = vmul.f32 %v1041, %v2097
      %v2230 = vmul.f32 %v1042, %v2098
      %v2231 = vmul.f32 %v1043, %v2099
      %v2232 = vmul.f32 %v1044, %v2100
      %v2233 = vmul.f32 %v1045, %v2101
      %v2234 = vmul.f32 %v1046, %v2102
      %v2235 = vmul.f32 %v1047, %v2103
      %v2236 = vmul.f32 %v1048, %v2104
      %v2237 = vmul.f32 %v1049, %v2105
      %v2238 = vmul.f32 %v1050, %v2106
      %v2239 = vmul.f32 %v1051, %v2107
      %v2240 = vmul.f32 %v1052, %v2108
      %v2241 = vmul.f32 %v1053, %v2109
      %v2242 = vmul.f32 %v1054, %v2110
      %v2243 = vmul.f32 %v1055, %v2111
      %v2244 = vmul.f32 %v1056, %v2112
      %v2245 = vmul.f32 %v1057, %v2113
      %v2246 = vmul.f32 %v1058, %v2114
      %v2247 = vmul.f32 %v1059, %v2115
      %v2248 = vmul.f32 %v1060, %v2116
      %v2249 = vmul.f32 %v1061, %v2117
      %v2250 = vmul.f32 %v1062, %v2118
      %v2251 = vmul.f32 %v1063, %v2119
      %v2252 = vmul.f32 %v1064, %v2120
      %v2253 = vmul.f32 %v1065, %v2121
      %v2254 = vmul.f32 %v1066, %v2122
      %v2255 = vmul.f32 %v1067, %v2123
      %v2256 = vmul.f32 %v1068, %v2124
      %v2257 = vmul.f32 %v1069, %v2125
      %v2258 = vmul.f32 %v1070, %v2126
      %v2259 = vmul.f32 %v1071, %v2127
      %v2260 = vmul.f32 %v1072, %v2128
      %v2261 = vmul.f32 %v1073, %v2129
      %v2262 = vmul.f32 %v1074, %v2130
      %v2263 = vmul.f32 %v1075, %v2131
      %v2264 = vmul.f32 %v1076, %v2132
      %v2265 = vmul.f32 %v1077, %v2133
      %v2266 = vmul.f32 %v1078, %v2134
      %v2267 = vmul.f32 %v1079, %v2135
      %v2268 = vmul.f32 %v1080, %v2136
      %v2269 = vmul.f32 %v1081, %v2137
      %v2270 = vsub.f32 %v2138, %v2204
      %v2271 = vsub.f32 %v2139, %v2205
      %v2272 = vsub.f32 %v2140, %v2206
      %v2273 = vsub.f32 %v2141, %v2207
      %v2274 = vsub.f32 %v2142, %v2208
      %v2275 = vsub.f32 %v2143, %v2209
      %v2276 = vsub.f32 %v2144, %v2210
      %v2277 = vsub.f32 %v2145, %v2211
      %v2278 = vsub.f32 %v2146, %v2212
      %v2279 = vsub.f32 %v2147, %v2213
      %v2280 = vsub.f32 %v2148, %v2214
      %v2281 = vsub.f32 %v2149, %v2215
      %v2282 = vsub.f32 %v2150, %v2216
      %v2283 = vsub.f32 %v2151, %v2217
      %v2284 = vsub.f32 %v2152, %v2218
      %v2285 = vsub.f32 %v2153, %v2219
      %v2286 = vsub.f32 %v2154, %v2220
      %v2287 = vsub.f32 %v2155, %v2221
      %v2288 = vsub.f32 %v2156, %v2222
      %v2289 = vsub.f32 %v2157, %v2223
      %v2290 = vsub.f32 %v2158, %v2224
      %v2291 = vsub.f32 %v2159, %v2225
      %v2292 = vsub.f32 %v2160, %v2226
      %v2293 = vsub.f32 %v2161, %v2227
      %v2294 = vsub.f32 %v2162, %v2228
      %v2295 = vsub.f32 %v2163, %v2229
      %v2296 = vsub.f32 %v2164, %v2230
      %v2297 = vsub.f32 %v2165, %v2231
      %v2298 = vsub.f32 %v2166, %v2232
      %v2299 = vsub.f32 %v2167, %v2233
      %v2300 = vsub.f32 %v2168, %v2234
      %v2301 = vsub.f32 %v2169, %v2235
      %v2302 = vsub.f32 %v2170, %v2236
      %v2303 = vsub.f32 %v2171, %v2237
      %v2304 = vsub.f32 %v2172, %v2238
      %v2305 = vsub.f32 %v2173, %v2239
      %v2306 = vsub.f32 %v2174, %v2240
      %v2307 = vsub.f32 %v2175, %v2241
      %v2308 = vsub.f32 %v2176, %v2242
      %v2309 = vsub.f32 %v2177, %v2243
      %v2310 = vsub.f32 %v2178, %v2244
      %v2311 = vsub.f32 %v2179, %v2245
      %v2312 = vsub.f32 %v2180, %v2246
      %v2313 = vsub.f32 %v2181, %v2247
      %v2314 = vsub.f32 %v2182, %v2248
      %v2315 = vsub.f32 %v2183, %v2249
      %v2316 = vsub.f32 %v2184, %v2250
      %v2317 = vsub.f32 %v2185, %v2251
      %v2318 = vsub.f32 %v2186, %v2252
      %v2319 = vsub.f32 %v2187, %v2253
      %v2320 = vsub.f32 %v2188, %v2254
      %v2321 = vsub.f32 %v2189, %v2255
      %v2322 = vsub.f32 %v2190, %v2256
      %v2323 = vsub.f32 %v2191, %v2257
      %v2324 = vsub.f32 %v2192, %v2258
      %v2325 = vsub.f32 %v2193, %v2259
      %v2326 = vsub.f32 %v2194, %v2260
      %v2327 = vsub.f32 %v2195, %v2261
      %v2328 = vsub.f32 %v2196, %v2262
      %v2329 = vsub.f32 %v2197, %v2263
      %v2330 = vsub.f32 %v2198, %v2264
      %v2331 = vsub.f32 %v2199, %v2265
      %v2332 = vsub.f32 %v2200, %v2266
      %v2333 = vsub.f32 %v2201, %v2267
      %v2334 = vsub.f32 %v2202, %v2268
      %v2335 = vsub.f32 %v2203, %v2269
      %2337 = vset.pattern.permute.xlu0 0
      %2338 = vperm.xlu0 %2337, %v2072
      %v2339 = vpop.permute.xlu0 %2338
      %2342 = vset.pattern.permute.xlu0 0
      %2343 = vperm.xlu0 %2342, %v2073
      %v2344 = vpop.permute.xlu0 %2343
      %2347 = vset.pattern.permute.xlu0 0
      %2348 = vperm.xlu0 %2347, %v2074
      %v2349 = vpop.permute.xlu0 %2348
      %2352 = vset.pattern.permute.xlu0 0
      %2353 = vperm.xlu0 %2352, %v2075
      %v2354 = vpop.permute.xlu0 %2353
      %2357 = vset.pattern.permute.xlu0 0
      %2358 = vperm.xlu0 %2357, %v2076
      %v2359 = vpop.permute.xlu0 %2358
      %2362 = vset.pattern.permute.xlu0 0
      %2363 = vperm.xlu0 %2362, %v2077
      %v2364 = vpop.permute.xlu0 %2363
      %2367 = vset.pattern.permute.xlu0 0
      %2368 = vperm.xlu0 %2367, %v2078
      %v2369 = vpop.permute.xlu0 %2368
      %2372 = vset.pattern.permute.xlu0 0
      %2373 = vperm.xlu0 %2372, %v2079
      %v2374 = vpop.permute.xlu0 %2373
      %2377 = vset.pattern.permute.xlu0 0
      %2378 = vperm.xlu0 %2377, %v2080
      %v2379 = vpop.permute.xlu0 %2378
      %2382 = vset.pattern.permute.xlu0 0
      %2383 = vperm.xlu0 %2382, %v2081
      %v2384 = vpop.permute.xlu0 %2383
      %2387 = vset.pattern.permute.xlu0 0
      %2388 = vperm.xlu0 %2387, %v2082
      %v2389 = vpop.permute.xlu0 %2388
      %2392 = vset.pattern.permute.xlu0 0
      %2393 = vperm.xlu0 %2392, %v2083
      %v2394 = vpop.permute.xlu0 %2393
      %2397 = vset.pattern.permute.xlu0 0
      %2398 = vperm.xlu0 %2397, %v2084
      %v2399 = vpop.permute.xlu0 %2398
      %2402 = vset.pattern.permute.xlu0 0
      %2403 = vperm.xlu0 %2402, %v2085
      %v2404 = vpop.permute.xlu0 %2403
      %2407 = vset.pattern.permute.xlu0 0
      %2408 = vperm.xlu0 %2407, %v2086
      %v2409 = vpop.permute.xlu0 %2408
      %2412 = vset.pattern.permute.xlu0 0
      %2413 = vperm.xlu0 %2412, %v2087
      %v2414 = vpop.permute.xlu0 %2413
      %2417 = vset.pattern.permute.xlu0 0
      %2418 = vperm.xlu0 %2417, %v2088
      %v2419 = vpop.permute.xlu0 %2418
      %2422 = vset.pattern.permute.xlu0 0
      %2423 = vperm.xlu0 %2422, %v2089
      %v2424 = vpop.permute.xlu0 %2423
      %2427 = vset.pattern.permute.xlu0 0
      %2428 = vperm.xlu0 %2427, %v2090
      %v2429 = vpop.permute.xlu0 %2428
      %2432 = vset.pattern.permute.xlu0 0
      %2433 = vperm.xlu0 %2432, %v2091
      %v2434 = vpop.permute.xlu0 %2433
      %2437 = vset.pattern.permute.xlu0 0
      %2438 = vperm.xlu0 %2437, %v2092
      %v2439 = vpop.permute.xlu0 %2438
      %2442 = vset.pattern.permute.xlu0 0
      %2443 = vperm.xlu0 %2442, %v2093
      %v2444 = vpop.permute.xlu0 %2443
      %2447 = vset.pattern.permute.xlu0 0
      %2448 = vperm.xlu0 %2447, %v2094
      %v2449 = vpop.permute.xlu0 %2448
      %2452 = vset.pattern.permute.xlu0 0
      %2453 = vperm.xlu0 %2452, %v2095
      %v2454 = vpop.permute.xlu0 %2453
      %2457 = vset.pattern.permute.xlu0 0
      %2458 = vperm.xlu0 %2457, %v2096
      %v2459 = vpop.permute.xlu0 %2458
      %2462 = vset.pattern.permute.xlu0 0
      %2463 = vperm.xlu0 %2462, %v2097
      %v2464 = vpop.permute.xlu0 %2463
      %2467 = vset.pattern.permute.xlu0 0
      %2468 = vperm.xlu0 %2467, %v2098
      %v2469 = vpop.permute.xlu0 %2468
      %2472 = vset.pattern.permute.xlu0 0
      %2473 = vperm.xlu0 %2472, %v2099
      %v2474 = vpop.permute.xlu0 %2473
      %2477 = vset.pattern.permute.xlu0 0
      %2478 = vperm.xlu0 %2477, %v2100
      %v2479 = vpop.permute.xlu0 %2478
      %2482 = vset.pattern.permute.xlu0 0
      %2483 = vperm.xlu0 %2482, %v2101
      %v2484 = vpop.permute.xlu0 %2483
      %2487 = vset.pattern.permute.xlu0 0
      %2488 = vperm.xlu0 %2487, %v2102
      %v2489 = vpop.permute.xlu0 %2488
      %2492 = vset.pattern.permute.xlu0 0
      %2493 = vperm.xlu0 %2492, %v2103
      %v2494 = vpop.permute.xlu0 %2493
      %2497 = vset.pattern.permute.xlu0 0
      %2498 = vperm.xlu0 %2497, %v2104
      %v2499 = vpop.permute.xlu0 %2498
      %2502 = vset.pattern.permute.xlu0 0
      %2503 = vperm.xlu0 %2502, %v2105
      %v2504 = vpop.permute.xlu0 %2503
      %2507 = vset.pattern.permute.xlu0 0
      %2508 = vperm.xlu0 %2507, %v2106
      %v2509 = vpop.permute.xlu0 %2508
      %2512 = vset.pattern.permute.xlu0 0
      %2513 = vperm.xlu0 %2512, %v2107
      %v2514 = vpop.permute.xlu0 %2513
      %2517 = vset.pattern.permute.xlu0 0
      %2518 = vperm.xlu0 %2517, %v2108
      %v2519 = vpop.permute.xlu0 %2518
      %2522 = vset.pattern.permute.xlu0 0
      %2523 = vperm.xlu0 %2522, %v2109
      %v2524 = vpop.permute.xlu0 %2523
      %2527 = vset.pattern.permute.xlu0 0
      %2528 = vperm.xlu0 %2527, %v2110
      %v2529 = vpop.permute.xlu0 %2528
      %2532 = vset.pattern.permute.xlu0 0
      %2533 = vperm.xlu0 %2532, %v2111
      %v2534 = vpop.permute.xlu0 %2533
      %2537 = vset.pattern.permute.xlu0 0
      %2538 = vperm.xlu0 %2537, %v2112
      %v2539 = vpop.permute.xlu0 %2538
      %2542 = vset.pattern.permute.xlu0 0
      %2543 = vperm.xlu0 %2542, %v2113
      %v2544 = vpop.permute.xlu0 %2543
      %2547 = vset.pattern.permute.xlu0 0
      %2548 = vperm.xlu0 %2547, %v2114
      %v2549 = vpop.permute.xlu0 %2548
      %2552 = vset.pattern.permute.xlu0 0
      %2553 = vperm.xlu0 %2552, %v2115
      %v2554 = vpop.permute.xlu0 %2553
      %2557 = vset.pattern.permute.xlu0 0
      %2558 = vperm.xlu0 %2557, %v2116
      %v2559 = vpop.permute.xlu0 %2558
      %2562 = vset.pattern.permute.xlu0 0
      %2563 = vperm.xlu0 %2562, %v2117
      %v2564 = vpop.permute.xlu0 %2563
      %2567 = vset.pattern.permute.xlu0 0
      %2568 = vperm.xlu0 %2567, %v2118
      %v2569 = vpop.permute.xlu0 %2568
      %2572 = vset.pattern.permute.xlu0 0
      %2573 = vperm.xlu0 %2572, %v2119
      %v2574 = vpop.permute.xlu0 %2573
      %2577 = vset.pattern.permute.xlu0 0
      %2578 = vperm.xlu0 %2577, %v2120
      %v2579 = vpop.permute.xlu0 %2578
      %2582 = vset.pattern.permute.xlu0 0
      %2583 = vperm.xlu0 %2582, %v2121
      %v2584 = vpop.permute.xlu0 %2583
      %2587 = vset.pattern.permute.xlu0 0
      %2588 = vperm.xlu0 %2587, %v2122
      %v2589 = vpop.permute.xlu0 %2588
      %2592 = vset.pattern.permute.xlu0 0
      %2593 = vperm.xlu0 %2592, %v2123
      %v2594 = vpop.permute.xlu0 %2593
      %2597 = vset.pattern.permute.xlu0 0
      %2598 = vperm.xlu0 %2597, %v2124
      %v2599 = vpop.permute.xlu0 %2598
      %2602 = vset.pattern.permute.xlu0 0
      %2603 = vperm.xlu0 %2602, %v2125
      %v2604 = vpop.permute.xlu0 %2603
      %2607 = vset.pattern.permute.xlu0 0
      %2608 = vperm.xlu0 %2607, %v2126
      %v2609 = vpop.permute.xlu0 %2608
      %2612 = vset.pattern.permute.xlu0 0
      %2613 = vperm.xlu0 %2612, %v2127
      %v2614 = vpop.permute.xlu0 %2613
      %2617 = vset.pattern.permute.xlu0 0
      %2618 = vperm.xlu0 %2617, %v2128
      %v2619 = vpop.permute.xlu0 %2618
      %2622 = vset.pattern.permute.xlu0 0
      %2623 = vperm.xlu0 %2622, %v2129
      %v2624 = vpop.permute.xlu0 %2623
      %2627 = vset.pattern.permute.xlu0 0
      %2628 = vperm.xlu0 %2627, %v2130
      %v2629 = vpop.permute.xlu0 %2628
      %2632 = vset.pattern.permute.xlu0 0
      %2633 = vperm.xlu0 %2632, %v2131
      %v2634 = vpop.permute.xlu0 %2633
      %2637 = vset.pattern.permute.xlu0 0
      %2638 = vperm.xlu0 %2637, %v2132
      %v2639 = vpop.permute.xlu0 %2638
      %2642 = vset.pattern.permute.xlu0 0
      %2643 = vperm.xlu0 %2642, %v2133
      %v2644 = vpop.permute.xlu0 %2643
      %2647 = vset.pattern.permute.xlu0 0
      %2648 = vperm.xlu0 %2647, %v2134
      %v2649 = vpop.permute.xlu0 %2648
      %2652 = vset.pattern.permute.xlu0 0
      %2653 = vperm.xlu0 %2652, %v2135
      %v2654 = vpop.permute.xlu0 %2653
      %2657 = vset.pattern.permute.xlu0 0
      %2658 = vperm.xlu0 %2657, %v2136
      %v2659 = vpop.permute.xlu0 %2658
      %2662 = vset.pattern.permute.xlu0 0
      %2663 = vperm.xlu0 %2662, %v2137
      %v2664 = vpop.permute.xlu0 %2663
      %v2666 = vmul.f32 %v223, %v2339
      %v2667 = vmul.f32 %v224, %v2339
      %v2668 = vmul.f32 %v225, %v2344
      %v2669 = vmul.f32 %v226, %v2344
      %v2670 = vmul.f32 %v227, %v2349
      %v2671 = vmul.f32 %v228, %v2349
      %v2672 = vmul.f32 %v229, %v2354
      %v2673 = vmul.f32 %v230, %v2354
      %v2674 = vmul.f32 %v231, %v2359
      %v2675 = vmul.f32 %v232, %v2359
      %v2676 = vmul.f32 %v233, %v2364
      %v2677 = vmul.f32 %v234, %v2364
      %v2678 = vmul.f32 %v235, %v2369
      %v2679 = vmul.f32 %v236, %v2369
      %v2680 = vmul.f32 %v237, %v2374
      %v2681 = vmul.f32 %v238, %v2374
      %v2682 = vmul.f32 %v239, %v2379
      %v2683 = vmul.f32 %v240, %v2379
      %v2684 = vmul.f32 %v241, %v2384
      %v2685 = vmul.f32 %v242, %v2384
      %v2686 = vmul.f32 %v243, %v2389
      %v2687 = vmul.f32 %v244, %v2389
      %v2688 = vmul.f32 %v245, %v2394
      %v2689 = vmul.f32 %v246, %v2394
      %v2690 = vmul.f32 %v247, %v2399
      %v2691 = vmul.f32 %v248, %v2399
      %v2692 = vmul.f32 %v249, %v2404
      %v2693 = vmul.f32 %v250, %v2404
      %v2694 = vmul.f32 %v251, %v2409
      %v2695 = vmul.f32 %v252, %v2409
      %v2696 = vmul.f32 %v253, %v2414
      %v2697 = vmul.f32 %v254, %v2414
      %v2698 = vmul.f32 %v255, %v2419
      %v2699 = vmul.f32 %v256, %v2419
      %v2700 = vmul.f32 %v257, %v2424
      %v2701 = vmul.f32 %v258, %v2424
      %v2702 = vmul.f32 %v259, %v2429
      %v2703 = vmul.f32 %v260, %v2429
      %v2704 = vmul.f32 %v261, %v2434
      %v2705 = vmul.f32 %v262, %v2434
      %v2706 = vmul.f32 %v263, %v2439
      %v2707 = vmul.f32 %v264, %v2439
      %v2708 = vmul.f32 %v265, %v2444
      %v2709 = vmul.f32 %v266, %v2444
      %v2710 = vmul.f32 %v267, %v2449
      %v2711 = vmul.f32 %v268, %v2449
      %v2712 = vmul.f32 %v269, %v2454
      %v2713 = vmul.f32 %v270, %v2454
      %v2714 = vmul.f32 %v271, %v2459
      %v2715 = vmul.f32 %v272, %v2459
      %v2716 = vmul.f32 %v273, %v2464
      %v2717 = vmul.f32 %v274, %v2464
      %v2718 = vmul.f32 %v275, %v2469
      %v2719 = vmul.f32 %v276, %v2469
      %v2720 = vmul.f32 %v277, %v2474
      %v2721 = vmul.f32 %v278, %v2474
      %v2722 = vmul.f32 %v279, %v2479
      %v2723 = vmul.f32 %v280, %v2479
      %v2724 = vmul.f32 %v281, %v2484
      %v2725 = vmul.f32 %v282, %v2484
      %v2726 = vmul.f32 %v283, %v2489
      %v2727 = vmul.f32 %v284, %v2489
      %v2728 = vmul.f32 %v285, %v2494
      %v2729 = vmul.f32 %v286, %v2494
      %v2730 = vmul.f32 %v287, %v2499
      %v2731 = vmul.f32 %v288, %v2499
      %v2732 = vmul.f32 %v289, %v2504
      %v2733 = vmul.f32 %v290, %v2504
      %v2734 = vmul.f32 %v291, %v2509
      %v2735 = vmul.f32 %v292, %v2509
      %v2736 = vmul.f32 %v293, %v2514
      %v2737 = vmul.f32 %v294, %v2514
      %v2738 = vmul.f32 %v295, %v2519
      %v2739 = vmul.f32 %v296, %v2519
      %v2740 = vmul.f32 %v297, %v2524
      %v2741 = vmul.f32 %v298, %v2524
      %v2742 = vmul.f32 %v299, %v2529
      %v2743 = vmul.f32 %v300, %v2529
      %v2744 = vmul.f32 %v301, %v2534
      %v2745 = vmul.f32 %v302, %v2534
      %v2746 = vmul.f32 %v303, %v2539
      %v2747 = vmul.f32 %v304, %v2539
      %v2748 = vmul.f32 %v305, %v2544
      %v2749 = vmul.f32 %v306, %v2544
      %v2750 = vmul.f32 %v307, %v2549
      %v2751 = vmul.f32 %v308, %v2549
      %v2752 = vmul.f32 %v309, %v2554
      %v2753 = vmul.f32 %v310, %v2554
      %v2754 = vmul.f32 %v311, %v2559
      %v2755 = vmul.f32 %v312, %v2559
      %v2756 = vmul.f32 %v313, %v2564
      %v2757 = vmul.f32 %v314, %v2564
      %v2758 = vmul.f32 %v315, %v2569
      %v2759 = vmul.f32 %v316, %v2569
      %v2760 = vmul.f32 %v317, %v2574
      %v2761 = vmul.f32 %v318, %v2574
      %v2762 = vmul.f32 %v319, %v2579
      %v2763 = vmul.f32 %v320, %v2579
      %v2764 = vmul.f32 %v321, %v2584
      %v2765 = vmul.f32 %v322, %v2584
      %v2766 = vmul.f32 %v323, %v2589
      %v2767 = vmul.f32 %v324, %v2589
      %v2768 = vmul.f32 %v325, %v2594
      %v2769 = vmul.f32 %v326, %v2594
      %v2770 = vmul.f32 %v327, %v2599
      %v2771 = vmul.f32 %v328, %v2599
      %v2772 = vmul.f32 %v329, %v2604
      %v2773 = vmul.f32 %v330, %v2604
      %v2774 = vmul.f32 %v331, %v2609
      %v2775 = vmul.f32 %v332, %v2609
      %v2776 = vmul.f32 %v333, %v2614
      %v2777 = vmul.f32 %v334, %v2614
      %v2778 = vmul.f32 %v335, %v2619
      %v2779 = vmul.f32 %v336, %v2619
      %v2780 = vmul.f32 %v337, %v2624
      %v2781 = vmul.f32 %v338, %v2624
      %v2782 = vmul.f32 %v339, %v2629
      %v2783 = vmul.f32 %v340, %v2629
      %v2784 = vmul.f32 %v341, %v2634
      %v2785 = vmul.f32 %v342, %v2634
      %v2786 = vmul.f32 %v343, %v2639
      %v2787 = vmul.f32 %v344, %v2639
      %v2788 = vmul.f32 %v345, %v2644
      %v2789 = vmul.f32 %v346, %v2644
      %v2790 = vmul.f32 %v347, %v2649
      %v2791 = vmul.f32 %v348, %v2649
      %v2792 = vmul.f32 %v349, %v2654
      %v2793 = vmul.f32 %v350, %v2654
      %v2794 = vmul.f32 %v351, %v2659
      %v2795 = vmul.f32 %v352, %v2659
      %v2796 = vmul.f32 %v353, %v2664
      %v2797 = vmul.f32 %v354, %v2664
      %2799 = vset.pattern.permute.xlu0 0
      %2800 = vperm.xlu0 %2799, %v2270
      %v2801 = vpop.permute.xlu0 %2800
      %2804 = vset.pattern.permute.xlu0 0
      %2805 = vperm.xlu0 %2804, %v2271
      %v2806 = vpop.permute.xlu0 %2805
      %2809 = vset.pattern.permute.xlu0 0
      %2810 = vperm.xlu0 %2809, %v2272
      %v2811 = vpop.permute.xlu0 %2810
      %2814 = vset.pattern.permute.xlu0 0
      %2815 = vperm.xlu0 %2814, %v2273
      %v2816 = vpop.permute.xlu0 %2815
      %2819 = vset.pattern.permute.xlu0 0
      %2820 = vperm.xlu0 %2819, %v2274
      %v2821 = vpop.permute.xlu0 %2820
      %2824 = vset.pattern.permute.xlu0 0
      %2825 = vperm.xlu0 %2824, %v2275
      %v2826 = vpop.permute.xlu0 %2825
      %2829 = vset.pattern.permute.xlu0 0
      %2830 = vperm.xlu0 %2829, %v2276
      %v2831 = vpop.permute.xlu0 %2830
      %2834 = vset.pattern.permute.xlu0 0
      %2835 = vperm.xlu0 %2834, %v2277
      %v2836 = vpop.permute.xlu0 %2835
      %2839 = vset.pattern.permute.xlu0 0
      %2840 = vperm.xlu0 %2839, %v2278
      %v2841 = vpop.permute.xlu0 %2840
      %2844 = vset.pattern.permute.xlu0 0
      %2845 = vperm.xlu0 %2844, %v2279
      %v2846 = vpop.permute.xlu0 %2845
      %2849 = vset.pattern.permute.xlu0 0
      %2850 = vperm.xlu0 %2849, %v2280
      %v2851 = vpop.permute.xlu0 %2850
      %2854 = vset.pattern.permute.xlu0 0
      %2855 = vperm.xlu0 %2854, %v2281
      %v2856 = vpop.permute.xlu0 %2855
      %2859 = vset.pattern.permute.xlu0 0
      %2860 = vperm.xlu0 %2859, %v2282
      %v2861 = vpop.permute.xlu0 %2860
      %2864 = vset.pattern.permute.xlu0 0
      %2865 = vperm.xlu0 %2864, %v2283
      %v2866 = vpop.permute.xlu0 %2865
      %2869 = vset.pattern.permute.xlu0 0
      %2870 = vperm.xlu0 %2869, %v2284
      %v2871 = vpop.permute.xlu0 %2870
      %2874 = vset.pattern.permute.xlu0 0
      %2875 = vperm.xlu0 %2874, %v2285
      %v2876 = vpop.permute.xlu0 %2875
      %2879 = vset.pattern.permute.xlu0 0
      %2880 = vperm.xlu0 %2879, %v2286
      %v2881 = vpop.permute.xlu0 %2880
      %2884 = vset.pattern.permute.xlu0 0
      %2885 = vperm.xlu0 %2884, %v2287
      %v2886 = vpop.permute.xlu0 %2885
      %2889 = vset.pattern.permute.xlu0 0
      %2890 = vperm.xlu0 %2889, %v2288
      %v2891 = vpop.permute.xlu0 %2890
      %2894 = vset.pattern.permute.xlu0 0
      %2895 = vperm.xlu0 %2894, %v2289
      %v2896 = vpop.permute.xlu0 %2895
      %2899 = vset.pattern.permute.xlu0 0
      %2900 = vperm.xlu0 %2899, %v2290
      %v2901 = vpop.permute.xlu0 %2900
      %2904 = vset.pattern.permute.xlu0 0
      %2905 = vperm.xlu0 %2904, %v2291
      %v2906 = vpop.permute.xlu0 %2905
      %2909 = vset.pattern.permute.xlu0 0
      %2910 = vperm.xlu0 %2909, %v2292
      %v2911 = vpop.permute.xlu0 %2910
      %2914 = vset.pattern.permute.xlu0 0
      %2915 = vperm.xlu0 %2914, %v2293
      %v2916 = vpop.permute.xlu0 %2915
      %2919 = vset.pattern.permute.xlu0 0
      %2920 = vperm.xlu0 %2919, %v2294
      %v2921 = vpop.permute.xlu0 %2920
      %2924 = vset.pattern.permute.xlu0 0
      %2925 = vperm.xlu0 %2924, %v2295
      %v2926 = vpop.permute.xlu0 %2925
      %2929 = vset.pattern.permute.xlu0 0
      %2930 = vperm.xlu0 %2929, %v2296
      %v2931 = vpop.permute.xlu0 %2930
      %2934 = vset.pattern.permute.xlu0 0
      %2935 = vperm.xlu0 %2934, %v2297
      %v2936 = vpop.permute.xlu0 %2935
      %2939 = vset.pattern.permute.xlu0 0
      %2940 = vperm.xlu0 %2939, %v2298
      %v2941 = vpop.permute.xlu0 %2940
      %2944 = vset.pattern.permute.xlu0 0
      %2945 = vperm.xlu0 %2944, %v2299
      %v2946 = vpop.permute.xlu0 %2945
      %2949 = vset.pattern.permute.xlu0 0
      %2950 = vperm.xlu0 %2949, %v2300
      %v2951 = vpop.permute.xlu0 %2950
      %2954 = vset.pattern.permute.xlu0 0
      %2955 = vperm.xlu0 %2954, %v2301
      %v2956 = vpop.permute.xlu0 %2955
      %2959 = vset.pattern.permute.xlu0 0
      %2960 = vperm.xlu0 %2959, %v2302
      %v2961 = vpop.permute.xlu0 %2960
      %2964 = vset.pattern.permute.xlu0 0
      %2965 = vperm.xlu0 %2964, %v2303
      %v2966 = vpop.permute.xlu0 %2965
      %2969 = vset.pattern.permute.xlu0 0
      %2970 = vperm.xlu0 %2969, %v2304
      %v2971 = vpop.permute.xlu0 %2970
      %2974 = vset.pattern.permute.xlu0 0
      %2975 = vperm.xlu0 %2974, %v2305
      %v2976 = vpop.permute.xlu0 %2975
      %2979 = vset.pattern.permute.xlu0 0
      %2980 = vperm.xlu0 %2979, %v2306
      %v2981 = vpop.permute.xlu0 %2980
      %2984 = vset.pattern.permute.xlu0 0
      %2985 = vperm.xlu0 %2984, %v2307
      %v2986 = vpop.permute.xlu0 %2985
      %2989 = vset.pattern.permute.xlu0 0
      %2990 = vperm.xlu0 %2989, %v2308
      %v2991 = vpop.permute.xlu0 %2990
      %2994 = vset.pattern.permute.xlu0 0
      %2995 = vperm.xlu0 %2994, %v2309
      %v2996 = vpop.permute.xlu0 %2995
      %2999 = vset.pattern.permute.xlu0 0
      %3000 = vperm.xlu0 %2999, %v2310
      %v3001 = vpop.permute.xlu0 %3000
      %3004 = vset.pattern.permute.xlu0 0
      %3005 = vperm.xlu0 %3004, %v2311
      %v3006 = vpop.permute.xlu0 %3005
      %3009 = vset.pattern.permute.xlu0 0
      %3010 = vperm.xlu0 %3009, %v2312
      %v3011 = vpop.permute.xlu0 %3010
      %3014 = vset.pattern.permute.xlu0 0
      %3015 = vperm.xlu0 %3014, %v2313
      %v3016 = vpop.permute.xlu0 %3015
      %3019 = vset.pattern.permute.xlu0 0
      %3020 = vperm.xlu0 %3019, %v2314
      %v3021 = vpop.permute.xlu0 %3020
      %3024 = vset.pattern.permute.xlu0 0
      %3025 = vperm.xlu0 %3024, %v2315
      %v3026 = vpop.permute.xlu0 %3025
      %3029 = vset.pattern.permute.xlu0 0
      %3030 = vperm.xlu0 %3029, %v2316
      %v3031 = vpop.permute.xlu0 %3030
      %3034 = vset.pattern.permute.xlu0 0
      %3035 = vperm.xlu0 %3034, %v2317
      %v3036 = vpop.permute.xlu0 %3035
      %3039 = vset.pattern.permute.xlu0 0
      %3040 = vperm.xlu0 %3039, %v2318
      %v3041 = vpop.permute.xlu0 %3040
      %3044 = vset.pattern.permute.xlu0 0
      %3045 = vperm.xlu0 %3044, %v2319
      %v3046 = vpop.permute.xlu0 %3045
      %3049 = vset.pattern.permute.xlu0 0
      %3050 = vperm.xlu0 %3049, %v2320
      %v3051 = vpop.permute.xlu0 %3050
      %3054 = vset.pattern.permute.xlu0 0
      %3055 = vperm.xlu0 %3054, %v2321
      %v3056 = vpop.permute.xlu0 %3055
      %3059 = vset.pattern.permute.xlu0 0
      %3060 = vperm.xlu0 %3059, %v2322
      %v3061 = vpop.permute.xlu0 %3060
      %3064 = vset.pattern.permute.xlu0 0
      %3065 = vperm.xlu0 %3064, %v2323
      %v3066 = vpop.permute.xlu0 %3065
      %3069 = vset.pattern.permute.xlu0 0
      %3070 = vperm.xlu0 %3069, %v2324
      %v3071 = vpop.permute.xlu0 %3070
      %3074 = vset.pattern.permute.xlu0 0
      %3075 = vperm.xlu0 %3074, %v2325
      %v3076 = vpop.permute.xlu0 %3075
      %3079 = vset.pattern.permute.xlu0 0
      %3080 = vperm.xlu0 %3079, %v2326
      %v3081 = vpop.permute.xlu0 %3080
      %3084 = vset.pattern.permute.xlu0 0
      %3085 = vperm.xlu0 %3084, %v2327
      %v3086 = vpop.permute.xlu0 %3085
      %3089 = vset.pattern.permute.xlu0 0
      %3090 = vperm.xlu0 %3089, %v2328
      %v3091 = vpop.permute.xlu0 %3090
      %3094 = vset.pattern.permute.xlu0 0
      %3095 = vperm.xlu0 %3094, %v2329
      %v3096 = vpop.permute.xlu0 %3095
      %3099 = vset.pattern.permute.xlu0 0
      %3100 = vperm.xlu0 %3099, %v2330
      %v3101 = vpop.permute.xlu0 %3100
      %3104 = vset.pattern.permute.xlu0 0
      %3105 = vperm.xlu0 %3104, %v2331
      %v3106 = vpop.permute.xlu0 %3105
      %3109 = vset.pattern.permute.xlu0 0
      %3110 = vperm.xlu0 %3109, %v2332
      %v3111 = vpop.permute.xlu0 %3110
      %3114 = vset.pattern.permute.xlu0 0
      %3115 = vperm.xlu0 %3114, %v2333
      %v3116 = vpop.permute.xlu0 %3115
      %3119 = vset.pattern.permute.xlu0 0
      %3120 = vperm.xlu0 %3119, %v2334
      %v3121 = vpop.permute.xlu0 %3120
      %3124 = vset.pattern.permute.xlu0 0
      %3125 = vperm.xlu0 %3124, %v2335
      %v3126 = vpop.permute.xlu0 %3125
      %v3128 = vadd.f32 %v2666, %v2801
      %v3129 = vadd.f32 %v2667, %v2801
      %v3130 = vadd.f32 %v2668, %v2806
      %v3131 = vadd.f32 %v2669, %v2806
      %v3132 = vadd.f32 %v2670, %v2811
      %v3133 = vadd.f32 %v2671, %v2811
      %v3134 = vadd.f32 %v2672, %v2816
      %v3135 = vadd.f32 %v2673, %v2816
      %v3136 = vadd.f32 %v2674, %v2821
      %v3137 = vadd.f32 %v2675, %v2821
      %v3138 = vadd.f32 %v2676, %v2826
      %v3139 = vadd.f32 %v2677, %v2826
      %v3140 = vadd.f32 %v2678, %v2831
      %v3141 = vadd.f32 %v2679, %v2831
      %v3142 = vadd.f32 %v2680, %v2836
      %v3143 = vadd.f32 %v2681, %v2836
      %v3144 = vadd.f32 %v2682, %v2841
      %v3145 = vadd.f32 %v2683, %v2841
      %v3146 = vadd.f32 %v2684, %v2846
      %v3147 = vadd.f32 %v2685, %v2846
      %v3148 = vadd.f32 %v2686, %v2851
      %v3149 = vadd.f32 %v2687, %v2851
      %v3150 = vadd.f32 %v2688, %v2856
      %v3151 = vadd.f32 %v2689, %v2856
      %v3152 = vadd.f32 %v2690, %v2861
      %v3153 = vadd.f32 %v2691, %v2861
      %v3154 = vadd.f32 %v2692, %v2866
      %v3155 = vadd.f32 %v2693, %v2866
      %v3156 = vadd.f32 %v2694, %v2871
      %v3157 = vadd.f32 %v2695, %v2871
      %v3158 = vadd.f32 %v2696, %v2876
      %v3159 = vadd.f32 %v2697, %v2876
      %v3160 = vadd.f32 %v2698, %v2881
      %v3161 = vadd.f32 %v2699, %v2881
      %v3162 = vadd.f32 %v2700, %v2886
      %v3163 = vadd.f32 %v2701, %v2886
      %v3164 = vadd.f32 %v2702, %v2891
      %v3165 = vadd.f32 %v2703, %v2891
      %v3166 = vadd.f32 %v2704, %v2896
      %v3167 = vadd.f32 %v2705, %v2896
      %v3168 = vadd.f32 %v2706, %v2901
      %v3169 = vadd.f32 %v2707, %v2901
      %v3170 = vadd.f32 %v2708, %v2906
      %v3171 = vadd.f32 %v2709, %v2906
      %v3172 = vadd.f32 %v2710, %v2911
      %v3173 = vadd.f32 %v2711, %v2911
      %v3174 = vadd.f32 %v2712, %v2916
      %v3175 = vadd.f32 %v2713, %v2916
      %v3176 = vadd.f32 %v2714, %v2921
      %v3177 = vadd.f32 %v2715, %v2921
      %v3178 = vadd.f32 %v2716, %v2926
      %v3179 = vadd.f32 %v2717, %v2926
      %v3180 = vadd.f32 %v2718, %v2931
      %v3181 = vadd.f32 %v2719, %v2931
      %v3182 = vadd.f32 %v2720, %v2936
      %v3183 = vadd.f32 %v2721, %v2936
      %v3184 = vadd.f32 %v2722, %v2941
      %v3185 = vadd.f32 %v2723, %v2941
      %v3186 = vadd.f32 %v2724, %v2946
      %v3187 = vadd.f32 %v2725, %v2946
      %v3188 = vadd.f32 %v2726, %v2951
      %v3189 = vadd.f32 %v2727, %v2951
      %v3190 = vadd.f32 %v2728, %v2956
      %v3191 = vadd.f32 %v2729, %v2956
      %v3192 = vadd.f32 %v2730, %v2961
      %v3193 = vadd.f32 %v2731, %v2961
      %v3194 = vadd.f32 %v2732, %v2966
      %v3195 = vadd.f32 %v2733, %v2966
      %v3196 = vadd.f32 %v2734, %v2971
      %v3197 = vadd.f32 %v2735, %v2971
      %v3198 = vadd.f32 %v2736, %v2976
      %v3199 = vadd.f32 %v2737, %v2976
      %v3200 = vadd.f32 %v2738, %v2981
      %v3201 = vadd.f32 %v2739, %v2981
      %v3202 = vadd.f32 %v2740, %v2986
      %v3203 = vadd.f32 %v2741, %v2986
      %v3204 = vadd.f32 %v2742, %v2991
      %v3205 = vadd.f32 %v2743, %v2991
      %v3206 = vadd.f32 %v2744, %v2996
      %v3207 = vadd.f32 %v2745, %v2996
      %v3208 = vadd.f32 %v2746, %v3001
      %v3209 = vadd.f32 %v2747, %v3001
      %v3210 = vadd.f32 %v2748, %v3006
      %v3211 = vadd.f32 %v2749, %v3006
      %v3212 = vadd.f32 %v2750, %v3011
      %v3213 = vadd.f32 %v2751, %v3011
      %v3214 = vadd.f32 %v2752, %v3016
      %v3215 = vadd.f32 %v2753, %v3016
      %v3216 = vadd.f32 %v2754, %v3021
      %v3217 = vadd.f32 %v2755, %v3021
      %v3218 = vadd.f32 %v2756, %v3026
      %v3219 = vadd.f32 %v2757, %v3026
      %v3220 = vadd.f32 %v2758, %v3031
      %v3221 = vadd.f32 %v2759, %v3031
      %v3222 = vadd.f32 %v2760, %v3036
      %v3223 = vadd.f32 %v2761, %v3036
      %v3224 = vadd.f32 %v2762, %v3041
      %v3225 = vadd.f32 %v2763, %v3041
      %v3226 = vadd.f32 %v2764, %v3046
      %v3227 = vadd.f32 %v2765, %v3046
      %v3228 = vadd.f32 %v2766, %v3051
      %v3229 = vadd.f32 %v2767, %v3051
      %v3230 = vadd.f32 %v2768, %v3056
      %v3231 = vadd.f32 %v2769, %v3056
      %v3232 = vadd.f32 %v2770, %v3061
      %v3233 = vadd.f32 %v2771, %v3061
      %v3234 = vadd.f32 %v2772, %v3066
      %v3235 = vadd.f32 %v2773, %v3066
      %v3236 = vadd.f32 %v2774, %v3071
      %v3237 = vadd.f32 %v2775, %v3071
      %v3238 = vadd.f32 %v2776, %v3076
      %v3239 = vadd.f32 %v2777, %v3076
      %v3240 = vadd.f32 %v2778, %v3081
      %v3241 = vadd.f32 %v2779, %v3081
      %v3242 = vadd.f32 %v2780, %v3086
      %v3243 = vadd.f32 %v2781, %v3086
      %v3244 = vadd.f32 %v2782, %v3091
      %v3245 = vadd.f32 %v2783, %v3091
      %v3246 = vadd.f32 %v2784, %v3096
      %v3247 = vadd.f32 %v2785, %v3096
      %v3248 = vadd.f32 %v2786, %v3101
      %v3249 = vadd.f32 %v2787, %v3101
      %v3250 = vadd.f32 %v2788, %v3106
      %v3251 = vadd.f32 %v2789, %v3106
      %v3252 = vadd.f32 %v2790, %v3111
      %v3253 = vadd.f32 %v2791, %v3111
      %v3254 = vadd.f32 %v2792, %v3116
      %v3255 = vadd.f32 %v2793, %v3116
      %v3256 = vadd.f32 %v2794, %v3121
      %v3257 = vadd.f32 %v2795, %v3121
      %v3258 = vadd.f32 %v2796, %v3126
      %v3259 = vadd.f32 %v2797, %v3126
      %3260 = vst [vmem:[%s221] sm:$0xff] %v3128
      %3261 = vst.msk [vmem:[%s221 + $0x8] sm:$0xff] %vm355, %v3129
      %3262 = vst [vmem:[%s221 + $0x10] sm:$0xff] %v3130
      %3263 = vst.msk [vmem:[%s221 + $0x18] sm:$0xff] %vm355, %v3131
      %3264 = vst [vmem:[%s221 + $0x20] sm:$0xff] %v3132
      %3265 = vst.msk [vmem:[%s221 + $0x28] sm:$0xff] %vm355, %v3133
      %3266 = vst [vmem:[%s221 + $0x30] sm:$0xff] %v3134
      %3267 = vst.msk [vmem:[%s221 + $0x38] sm:$0xff] %vm355, %v3135
      %3268 = vst [vmem:[%s221 + $0x40] sm:$0xff] %v3136
      %3269 = vst.msk [vmem:[%s221 + $0x48] sm:$0xff] %vm355, %v3137
      %3270 = vst [vmem:[%s221 + $0x50] sm:$0xff] %v3138
      %3271 = vst.msk [vmem:[%s221 + $0x58] sm:$0xff] %vm355, %v3139
      %3272 = vst [vmem:[%s221 + $0x60] sm:$0xff] %v3140
      %3273 = vst.msk [vmem:[%s221 + $0x68] sm:$0xff] %vm355, %v3141
      %3274 = vst [vmem:[%s221 + $0x70] sm:$0xff] %v3142
      %3275 = vst.msk [vmem:[%s221 + $0x78] sm:$0xff] %vm355, %v3143
      %3276 = vst [vmem:[%s221 + $0x80] sm:$0xff] %v3144
      %3277 = vst.msk [vmem:[%s221 + $0x88] sm:$0xff] %vm355, %v3145
      %3278 = vst [vmem:[%s221 + $0x90] sm:$0xff] %v3146
      %3279 = vst.msk [vmem:[%s221 + $0x98] sm:$0xff] %vm355, %v3147
      %3280 = vst [vmem:[%s221 + $0xa0] sm:$0xff] %v3148
      %3281 = vst.msk [vmem:[%s221 + $0xa8] sm:$0xff] %vm355, %v3149
      %3282 = vst [vmem:[%s221 + $0xb0] sm:$0xff] %v3150
      %3283 = vst.msk [vmem:[%s221 + $0xb8] sm:$0xff] %vm355, %v3151
      %3284 = vst [vmem:[%s221 + $0xc0] sm:$0xff] %v3152
      %3285 = vst.msk [vmem:[%s221 + $0xc8] sm:$0xff] %vm355, %v3153
      %3286 = vst [vmem:[%s221 + $0xd0] sm:$0xff] %v3154
      %3287 = vst.msk [vmem:[%s221 + $0xd8] sm:$0xff] %vm355, %v3155
      %3288 = vst [vmem:[%s221 + $0xe0] sm:$0xff] %v3156
      %3289 = vst.msk [vmem:[%s221 + $0xe8] sm:$0xff] %vm355, %v3157
      %3290 = vst [vmem:[%s221 + $0xf0] sm:$0xff] %v3158
      %3291 = vst.msk [vmem:[%s221 + $0xf8] sm:$0xff] %vm355, %v3159
      %3292 = vst [vmem:[%s221 + $0x100] sm:$0xff] %v3160
      %3293 = vst.msk [vmem:[%s221 + $0x108] sm:$0xff] %vm355, %v3161
      %3294 = vst [vmem:[%s221 + $0x110] sm:$0xff] %v3162
      %3295 = vst.msk [vmem:[%s221 + $0x118] sm:$0xff] %vm355, %v3163
      %3296 = vst [vmem:[%s221 + $0x120] sm:$0xff] %v3164
      %3297 = vst.msk [vmem:[%s221 + $0x128] sm:$0xff] %vm355, %v3165
      %3298 = vst [vmem:[%s221 + $0x130] sm:$0xff] %v3166
      %3299 = vst.msk [vmem:[%s221 + $0x138] sm:$0xff] %vm355, %v3167
      %3300 = vst [vmem:[%s221 + $0x140] sm:$0xff] %v3168
      %3301 = vst.msk [vmem:[%s221 + $0x148] sm:$0xff] %vm355, %v3169
      %3302 = vst [vmem:[%s221 + $0x150] sm:$0xff] %v3170
      %3303 = vst.msk [vmem:[%s221 + $0x158] sm:$0xff] %vm355, %v3171
      %3304 = vst [vmem:[%s221 + $0x160] sm:$0xff] %v3172
      %3305 = vst.msk [vmem:[%s221 + $0x168] sm:$0xff] %vm355, %v3173
      %3306 = vst [vmem:[%s221 + $0x170] sm:$0xff] %v3174
      %3307 = vst.msk [vmem:[%s221 + $0x178] sm:$0xff] %vm355, %v3175
      %3308 = vst [vmem:[%s221 + $0x180] sm:$0xff] %v3176
      %3309 = vst.msk [vmem:[%s221 + $0x188] sm:$0xff] %vm355, %v3177
      %3310 = vst [vmem:[%s221 + $0x190] sm:$0xff] %v3178
      %3311 = vst.msk [vmem:[%s221 + $0x198] sm:$0xff] %vm355, %v3179
      %3312 = vst [vmem:[%s221 + $0x1a0] sm:$0xff] %v3180
      %3313 = vst.msk [vmem:[%s221 + $0x1a8] sm:$0xff] %vm355, %v3181
      %3314 = vst [vmem:[%s221 + $0x1b0] sm:$0xff] %v3182
      %3315 = vst.msk [vmem:[%s221 + $0x1b8] sm:$0xff] %vm355, %v3183
      %3316 = vst [vmem:[%s221 + $0x1c0] sm:$0xff] %v3184
      %3317 = vst.msk [vmem:[%s221 + $0x1c8] sm:$0xff] %vm355, %v3185
      %3318 = vst [vmem:[%s221 + $0x1d0] sm:$0xff] %v3186
      %3319 = vst.msk [vmem:[%s221 + $0x1d8] sm:$0xff] %vm355, %v3187
      %3320 = vst [vmem:[%s221 + $0x1e0] sm:$0xff] %v3188
      %3321 = vst.msk [vmem:[%s221 + $0x1e8] sm:$0xff] %vm355, %v3189
      %3322 = vst [vmem:[%s221 + $0x1f0] sm:$0xff] %v3190
      %3323 = vst.msk [vmem:[%s221 + $0x1f8] sm:$0xff] %vm355, %v3191
      %3324 = vst [vmem:[%s221 + $0x200] sm:$0xff] %v3192
      %3325 = vst.msk [vmem:[%s221 + $0x208] sm:$0xff] %vm355, %v3193
      %3326 = vst [vmem:[%s221 + $0x210] sm:$0xff] %v3194
      %3327 = vst.msk [vmem:[%s221 + $0x218] sm:$0xff] %vm355, %v3195
      %3328 = vst [vmem:[%s221 + $0x220] sm:$0xff] %v3196
      %3329 = vst.msk [vmem:[%s221 + $0x228] sm:$0xff] %vm355, %v3197
      %3330 = vst [vmem:[%s221 + $0x230] sm:$0xff] %v3198
      %3331 = vst.msk [vmem:[%s221 + $0x238] sm:$0xff] %vm355, %v3199
      %3332 = vst [vmem:[%s221 + $0x240] sm:$0xff] %v3200
      %3333 = vst.msk [vmem:[%s221 + $0x248] sm:$0xff] %vm355, %v3201
      %3334 = vst [vmem:[%s221 + $0x250] sm:$0xff] %v3202
      %3335 = vst.msk [vmem:[%s221 + $0x258] sm:$0xff] %vm355, %v3203
      %3336 = vst [vmem:[%s221 + $0x260] sm:$0xff] %v3204
      %3337 = vst.msk [vmem:[%s221 + $0x268] sm:$0xff] %vm355, %v3205
      %3338 = vst [vmem:[%s221 + $0x270] sm:$0xff] %v3206
      %3339 = vst.msk [vmem:[%s221 + $0x278] sm:$0xff] %vm355, %v3207
      %3340 = vst [vmem:[%s221 + $0x280] sm:$0xff] %v3208
      %3341 = vst.msk [vmem:[%s221 + $0x288] sm:$0xff] %vm355, %v3209
      %3342 = vst [vmem:[%s221 + $0x290] sm:$0xff] %v3210
      %3343 = vst.msk [vmem:[%s221 + $0x298] sm:$0xff] %vm355, %v3211
      %3344 = vst [vmem:[%s221 + $0x2a0] sm:$0xff] %v3212
      %3345 = vst.msk [vmem:[%s221 + $0x2a8] sm:$0xff] %vm355, %v3213
      %3346 = vst [vmem:[%s221 + $0x2b0] sm:$0xff] %v3214
      %3347 = vst.msk [vmem:[%s221 + $0x2b8] sm:$0xff] %vm355, %v3215
      %3348 = vst [vmem:[%s221 + $0x2c0] sm:$0xff] %v3216
      %3349 = vst.msk [vmem:[%s221 + $0x2c8] sm:$0xff] %vm355, %v3217
      %3350 = vst [vmem:[%s221 + $0x2d0] sm:$0xff] %v3218
      %3351 = vst.msk [vmem:[%s221 + $0x2d8] sm:$0xff] %vm355, %v3219
      %3352 = vst [vmem:[%s221 + $0x2e0] sm:$0xff] %v3220
      %3353 = vst.msk [vmem:[%s221 + $0x2e8] sm:$0xff] %vm355, %v3221
      %3354 = vst [vmem:[%s221 + $0x2f0] sm:$0xff] %v3222
      %3355 = vst.msk [vmem:[%s221 + $0x2f8] sm:$0xff] %vm355, %v3223
      %3356 = vst [vmem:[%s221 + $0x300] sm:$0xff] %v3224
      %3357 = vst.msk [vmem:[%s221 + $0x308] sm:$0xff] %vm355, %v3225
      %3358 = vst [vmem:[%s221 + $0x310] sm:$0xff] %v3226
      %3359 = vst.msk [vmem:[%s221 + $0x318] sm:$0xff] %vm355, %v3227
      %3360 = vst [vmem:[%s221 + $0x320] sm:$0xff] %v3228
      %3361 = vst.msk [vmem:[%s221 + $0x328] sm:$0xff] %vm355, %v3229
      %3362 = vst [vmem:[%s221 + $0x330] sm:$0xff] %v3230
      %3363 = vst.msk [vmem:[%s221 + $0x338] sm:$0xff] %vm355, %v3231
      %3364 = vst [vmem:[%s221 + $0x340] sm:$0xff] %v3232
      %3365 = vst.msk [vmem:[%s221 + $0x348] sm:$0xff] %vm355, %v3233
      %3366 = vst [vmem:[%s221 + $0x350] sm:$0xff] %v3234
      %3367 = vst.msk [vmem:[%s221 + $0x358] sm:$0xff] %vm355, %v3235
      %3368 = vst [vmem:[%s221 + $0x360] sm:$0xff] %v3236
      %3369 = vst.msk [vmem:[%s221 + $0x368] sm:$0xff] %vm355, %v3237
      %3370 = vst [vmem:[%s221 + $0x370] sm:$0xff] %v3238
      %3371 = vst.msk [vmem:[%s221 + $0x378] sm:$0xff] %vm355, %v3239
      %3372 = vst [vmem:[%s221 + $0x380] sm:$0xff] %v3240
      %3373 = vst.msk [vmem:[%s221 + $0x388] sm:$0xff] %vm355, %v3241
      %3374 = vst [vmem:[%s221 + $0x390] sm:$0xff] %v3242
      %3375 = vst.msk [vmem:[%s221 + $0x398] sm:$0xff] %vm355, %v3243
      %3376 = vst [vmem:[%s221 + $0x3a0] sm:$0xff] %v3244
      %3377 = vst.msk [vmem:[%s221 + $0x3a8] sm:$0xff] %vm355, %v3245
      %3378 = vst [vmem:[%s221 + $0x3b0] sm:$0xff] %v3246
      %3379 = vst.msk [vmem:[%s221 + $0x3b8] sm:$0xff] %vm355, %v3247
      %3380 = vst [vmem:[%s221 + $0x3c0] sm:$0xff] %v3248
      %3381 = vst.msk [vmem:[%s221 + $0x3c8] sm:$0xff] %vm355, %v3249
      %3382 = vst [vmem:[%s221 + $0x3d0] sm:$0xff] %v3250
      %3383 = vst.msk [vmem:[%s221 + $0x3d8] sm:$0xff] %vm355, %v3251
      %3384 = vst [vmem:[%s221 + $0x3e0] sm:$0xff] %v3252
      %3385 = vst.msk [vmem:[%s221 + $0x3e8] sm:$0xff] %vm355, %v3253
      %3386 = vst [vmem:[%s221 + $0x3f0] sm:$0xff] %v3254
      %3387 = vst.msk [vmem:[%s221 + $0x3f8] sm:$0xff] %vm355, %v3255
      %3388 = vst [vmem:[%s221 + $0x400] sm:$0xff] %v3256
      %3389 = vst.msk [vmem:[%s221 + $0x408] sm:$0xff] %vm355, %v3257
      %3390 = vst [vmem:[%s221 + $0x410] sm:$0xff] %v3258
      %3391 = vst.msk [vmem:[%s221 + $0x418] sm:$0xff] %vm355, %v3259
      %s3392 = smul.u32 66, %s14
      %p3393 = scmp.lt.s32.totalorder %s3392, 131
      %s3394 = scalar_select %p3393, %s3392, 131
      %s3395 = smul.addr %s3394, 2
      %s3396 = smul.addr %s3395, 8
      %s3397 = scalar_lea.vmem %s3, %s3396
      // Predicated region
      $region33: #{tpu_custom_call.1} parent=31 // pred_check
        %p3398 = pneg %p110
      $region34: #{tpu_custom_call.1} parent=31 // pred_check_branch
        %3400 = sbr.rel (%p3398) target = $region36
      $region35: #{tpu_custom_call.1} parent=31 // pred_region
        %s3401 = smul.u32 66, %s14
      $region36: #{tpu_custom_call.1} parent=31 // pred_fallthru
        _
    $region32: #{tpu_custom_call.1} parent=5 // pred_fallthru
      _
    %p3402 = scmp.le.s32.totalorder 2, %s9
    // Predicated region
    $region37: #{tpu_custom_call.1} parent=5 // pred_check
      %p3403 = pneg %p3402
    $region38: #{tpu_custom_call.1} parent=5 // pred_check_branch
      %3405 = sbr.rel (%p3403) target = $region40
    $region39: #{tpu_custom_call.1} parent=5 // pred_region
      %s3406 = ssub.s32 %s9, 2
      // Predicated region
      $region41: #{tpu_custom_call.1} parent=39 // pred_check
        %p3407 = pneg %p116
      $region42: #{tpu_custom_call.1} parent=39 // pred_check_branch
        %3409 = sbr.rel (%p3407) target = $region44
      $region43: #{tpu_custom_call.1} parent=39 // pred_region
        %s3410 = smul.u32 66, %s15
        %p3411 = scmp.lt.s32.totalorder %s3410, 131
        %s3412 = scalar_select %p3411, %s3410, 131
        %s3413 = smul.addr %s3412, 2
        %s3414 = smul.addr %s3413, 8
        %s3415 = scalar_lea.vmem %s3, %s3414
      $region44: #{tpu_custom_call.1} parent=39 // pred_fallthru
        _
    $region40: #{tpu_custom_call.1} parent=5 // pred_fallthru
      _
  $region6: #{tpu_custom_call.1} parent=0 // loop_footer
    %s13 = sadd.s32 1, %s9
  $region7: #{tpu_custom_call.1} parent=0 // loop_footer_branch
    %8 = sbr.rel target = $region3
  $region8: #{tpu_custom_call.1} parent=0 // loop_exit
    _

</llo_original>
